<compile_context>
chip_gen: v7x
topology: tpu7x:2x2x1
jax: 0.10.0
libtpu: 0.0.40
codegen_flags: <defaults>
</compile_context>

<pallas_src>
import functools
import math

import jax
import jax.numpy as jnp
from jax import lax
from jax.experimental import pallas as pl
from jax.experimental.pallas import tpu as pltpu


def _layernorm(y, gamma, beta, eps=1e-6):
    """LayerNorm over the last dim, all math in f32 (eps matches the module)."""
    mu = jnp.mean(y, axis=-1, keepdims=True)
    var = jnp.mean((y - mu) ** 2, axis=-1, keepdims=True)
    return (y - mu) * lax.rsqrt(var + eps) * gamma + beta


def encoder_layer_kernel(
    x_ref,
    wqkv_ref, bqkv_ref,
    wo_ref, bo_ref,
    w1_ref, b1_ref, w2_ref, b2_ref,
    g1_ref, be1_ref, g2_ref, be2_ref,
    o_ref,
    *, num_heads,
):
    x = x_ref[0]                                   # (S, D) float32
    S, D = x.shape
    hidden = wo_ref.shape[0]
    depth = hidden // num_heads
    bf16 = jnp.bfloat16

    # ---- fused QKV projection: one (S, D) @ (D, 3*hidden) MXU matmul ----
    # (the 1/sqrt(depth) scale is pre-folded into the Q columns host-side)
    qkv = jnp.dot(x.astype(bf16), wqkv_ref[...],
                  preferred_element_type=jnp.float32) + bqkv_ref[...]   # (S, 3*hidden) f32

    def to_heads(t):                               # (S, hidden) -> (H, S, depth)
        return t.reshape(S, num_heads, depth).transpose(1, 0, 2)

    q = to_heads(qkv[:, 0 * hidden:1 * hidden].astype(bf16))
    k = to_heads(qkv[:, 1 * hidden:2 * hidden].astype(bf16))
    v = to_heads(qkv[:, 2 * hidden:3 * hidden].astype(bf16))

    # ---- scaled dot-product attention, batched over heads (f32 softmax) ----
    # TODO(synk): flash-style KV tiling for large S (v7x VMEM).
    logits = jnp.einsum("hqe,hke->hqk", q, k,
                        preferred_element_type=jnp.float32)             # (H,S,S)
    m = jnp.max(logits, axis=-1, keepdims=True)
    e = jnp.exp(logits - m)
    probs = e * pl.reciprocal(jnp.sum(e, axis=-1, keepdims=True), approx=True)
    ctx = jnp.einsum("hqk,hke->hqe", probs.astype(bf16), v,
                     preferred_element_type=jnp.float32)                # (H,S,depth)

    # ---- output projection: merge heads then one (S,hidden)@(hidden,D) matmul
    #      (head reduction folded into the MXU K accumulation) ----
    ctx_m = ctx.astype(bf16).transpose(1, 0, 2).reshape(S, hidden)
    attn_out = jnp.dot(ctx_m, wo_ref[...],
                       preferred_element_type=jnp.float32) + bo_ref[...]

    # ---- residual + LayerNorm1 (dropout == identity in eval) ----
    out1 = _layernorm(x + attn_out, g1_ref[...], be1_ref[...])

    # ---- pointwise feed-forward (bf16 matmuls, f32 accumulation) ----
    # TODO(synk): tile over dff for very large S*dff on v7x.
    h1 = jnp.maximum(
        jnp.dot(out1.astype(bf16), w1_ref[...],
                preferred_element_type=jnp.float32) + b1_ref[...],
        0.0,
    )                                                                   # (S, dff)
    ffn = jnp.dot(h1.astype(bf16), w2_ref[...],
                  preferred_element_type=jnp.float32) + b2_ref[...]

    # ---- residual + LayerNorm2 ----
    o_ref[0] = _layernorm(out1 + ffn, g2_ref[...], be2_ref[...])


def _pick_vmem_limit(needed_bytes):
    """Scoped VMEM limit: cover the resident footprint, stay safe per chip."""
    cap = 48 * 1024 * 1024               # safe everywhere (v7x has 64 MiB phys)
    try:
        cap = int(0.75 * pltpu.get_tpu_info().vmem_capacity_bytes)
    except Exception:
        pass
    return int(min(cap, max(16 * 1024 * 1024, needed_bytes)))


def encoder_layer_forward(x, params, num_heads):
    B, S, D = x.shape
    (wq, bq, wk, bk, wv, bv, wo, bo, w1, b1, w2, b2, g1, be1, g2, be2) = params
    hidden = wq.shape[1]
    depth = hidden // num_heads
    dff = w1.shape[1]
    bf16 = jnp.bfloat16

    # Host-side re-layout (one-time, free):
    #  * fuse q/k/v projections -> single (D, 3*hidden) matrix + (1, 3*hidden) bias
    #  * fold 1/sqrt(depth) into the Q columns
    #  * bf16 matmul weights (f32 accumulation in-kernel), f32 biases / LN params
    scale = 1.0 / math.sqrt(depth)
    wqkv = jnp.concatenate([wq * scale, wk, wv], axis=1).astype(bf16)        # (D, 3*hidden)
    bqkv = jnp.concatenate([bq * scale, bk, bv], axis=1).astype(jnp.float32)  # (1, 3*hidden)

    kernel_params = (
        wqkv, bqkv,
        wo.astype(bf16), bo.astype(jnp.float32),
        w1.astype(bf16), b1.astype(jnp.float32),
        w2.astype(bf16), b2.astype(jnp.float32),
        g1.astype(jnp.float32), be1.astype(jnp.float32),
        g2.astype(jnp.float32), be2.astype(jnp.float32),
    )

    def full_spec(a):  # whole array resident, grid-invariant
        return pl.BlockSpec(a.shape, lambda b, _z=(0,) * a.ndim: _z)

    in_specs = [pl.BlockSpec((1, S, D), lambda b: (b, 0, 0))]
    in_specs += [full_spec(p) for p in kernel_params]

    def nbytes(a):
        return int(a.size) * a.dtype.itemsize

    weight_bytes = sum(nbytes(p) for p in kernel_params)
    io_block_bytes = S * D * 4
    inter_bytes = (S * 3 * hidden * 4                 # fused qkv (f32)
                   + 3 * num_heads * S * S * 4        # logits / e / probs
                   + 3 * num_heads * S * depth * 4    # per-head q/k/v/ctx
                   + 2 * S * dff * 4                  # h1 (+ bf16 copy margin)
                   + 6 * S * D * 4)                   # residual/LN temporaries
    needed = 2 * weight_bytes + 4 * io_block_bytes + 2 * inter_bytes
    vmem_limit = _pick_vmem_limit(needed)

    flops = 2 * B * S * (3 * D * hidden + 2 * S * hidden + hidden * D + 2 * D * dff)
    transcendentals = B * num_heads * S * (S + 1) + 2 * B * S
    bytes_accessed = 2 * B * S * D * 4 + weight_bytes

    kernel = functools.partial(encoder_layer_kernel, num_heads=num_heads)

    return pl.pallas_call(
        kernel,
        out_shape=jax.ShapeDtypeStruct((B, S, D), jnp.float32),
        grid_spec=pltpu.PrefetchScalarGridSpec(
            num_scalar_prefetch=0,
            grid=(B,),
            in_specs=in_specs,
            out_specs=pl.BlockSpec((1, S, D), lambda b: (b, 0, 0)),
        ),
        compiler_params=pltpu.CompilerParams(
            dimension_semantics=("parallel",),
            vmem_limit_bytes=vmem_limit,
        ),
        cost_estimate=pl.CostEstimate(
            flops=flops,
            transcendentals=transcendentals,
            bytes_accessed=bytes_accessed,
        ),
    )(x, *kernel_params)


def make_params(key, d_model, num_heads, dff, hidden_size=None):
    """Deterministic parameter init. Weights stored as [in, out]; biases as [1, out]."""
    hidden = d_model if hidden_size is None else hidden_size
    keys = jax.random.split(key, 12)

    def lin(k, fan_in, fan_out):
        bound = 1.0 / math.sqrt(fan_in)
        kw, kb = jax.random.split(k)
        w = jax.random.uniform(kw, (fan_in, fan_out), jnp.float32, -bound, bound)
        b = jax.random.uniform(kb, (1, fan_out), jnp.float32, -bound, bound)
        return w, b

    wq, bq = lin(keys[0], d_model, hidden)
    wk, bk = lin(keys[1], d_model, hidden)
    wv, bv = lin(keys[2], d_model, hidden)
    wo, bo = lin(keys[3], hidden, d_model)
    w1, b1 = lin(keys[4], d_model, dff)
    w2, b2 = lin(keys[5], dff, d_model)
    g1 = jnp.ones((1, d_model), jnp.float32)
    be1 = jnp.zeros((1, d_model), jnp.float32)
    g2 = jnp.ones((1, d_model), jnp.float32)
    be2 = jnp.zeros((1, d_model), jnp.float32)
    return (wq, bq, wk, bk, wv, bv, wo, bo, w1, b1, w2, b2, g1, be1, g2, be2)


def reference_forward(x, params, num_heads):
    """Pure-JAX f32 reference mirroring the PyTorch module (eval mode)."""
    (wq, bq, wk, bk, wv, bv, wo, bo, w1, b1, w2, b2, g1, be1, g2, be2) = params
    B, S, D = x.shape
    hidden = wq.shape[1]
    depth = hidden // num_heads

    def split_head(t):  # (B,S,hidden) -> (B,nh,S,depth)
        return t.reshape(B, S, num_heads, depth).transpose(0, 2, 1, 3)

    q = split_head(x @ wq + bq)
    k = split_head(x @ wk + bk)
    v = split_head(x @ wv + bv)
    logits = jnp.einsum("bhqd,bhkd->bhqk", q, k) / math.sqrt(depth)
    attn = jax.nn.softmax(logits, axis=-1)
    o = jnp.einsum("bhqk,bhkd->bhqd", attn, v)
    o = o.transpose(0, 2, 1, 3).reshape(B, S, hidden)
    attn_out = o @ wo + bo

    def ln(y, g, b):
        mu = jnp.mean(y, axis=-1, keepdims=True)
        var = jnp.mean((y - mu) ** 2, axis=-1, keepdims=True)
        return (y - mu) / jnp.sqrt(var + 1e-6) * g + b

    out1 = ln(x + attn_out, g1, be1)
    ffn = jnp.maximum(out1 @ w1 + b1, 0.0) @ w2 + b2
    return ln(out1 + ffn, g2, be2)


if __name__ == "__main__":
    B, S, D = 2, 8, 32
    NUM_HEADS, DFF = 4, 64

    key = jax.random.PRNGKey(0)
    kx, kp = jax.random.split(key)
    x = jax.random.normal(kx, (B, S, D), jnp.float32)
    params = make_params(kp, D, NUM_HEADS, DFF)

    out = encoder_layer_forward(x, params, NUM_HEADS)
    out = jax.block_until_ready(out)

    ref = reference_forward(x, params, NUM_HEADS)
    assert out.shape == (B, S, D)
    # bf16 matmul operands + approx reciprocal in softmax vs pure-f32 reference:
    # observed error is ~1e-2; allow 5e-2.
    assert jnp.allclose(out, ref, atol=5e-2, rtol=5e-2), "mismatch vs reference"
    print("KERNEL_OK")
</pallas_src>

<mosaic_0001>
module attributes {stable_mosaic.version = 11 : i64} {
  func.func @encoder_layer_kernel(%arg0: i32, %arg1: memref<1x8x32xf32, #tpu.memory_space<vmem>>, %arg2: memref<32x96xbf16, #tpu.memory_space<vmem>>, %arg3: memref<1x96xf32, #tpu.memory_space<vmem>>, %arg4: memref<32x32xbf16, #tpu.memory_space<vmem>>, %arg5: memref<1x32xf32, #tpu.memory_space<vmem>>, %arg6: memref<32x64xbf16, #tpu.memory_space<vmem>>, %arg7: memref<1x64xf32, #tpu.memory_space<vmem>>, %arg8: memref<64x32xbf16, #tpu.memory_space<vmem>>, %arg9: memref<1x32xf32, #tpu.memory_space<vmem>>, %arg10: memref<1x32xf32, #tpu.memory_space<vmem>>, %arg11: memref<1x32xf32, #tpu.memory_space<vmem>>, %arg12: memref<1x32xf32, #tpu.memory_space<vmem>>, %arg13: memref<1x32xf32, #tpu.memory_space<vmem>>, %arg14: memref<1x8x32xf32, #tpu.memory_space<vmem>>) attributes {dimension_semantics = [#tpu.dimension_semantics<parallel>], iteration_bounds = array<i64: 2>, scalar_prefetch = 0 : i64, scratch_operands = 0 : i64, tpu.core_type = #tpu.core_type<tc>, window_params = [{transform_indices = @transform_0, window_bounds = array<i64: 1, 8, 32>}, {pipeline_mode = #tpu.pipeline_mode<synchronous>, transform_indices = @transform_1, window_bounds = array<i64: 32, 96>}, {pipeline_mode = #tpu.pipeline_mode<synchronous>, transform_indices = @transform_2, window_bounds = array<i64: 1, 96>}, {pipeline_mode = #tpu.pipeline_mode<synchronous>, transform_indices = @transform_3, window_bounds = array<i64: 32, 32>}, {pipeline_mode = #tpu.pipeline_mode<synchronous>, transform_indices = @transform_4, window_bounds = array<i64: 1, 32>}, {pipeline_mode = #tpu.pipeline_mode<synchronous>, transform_indices = @transform_5, window_bounds = array<i64: 32, 64>}, {pipeline_mode = #tpu.pipeline_mode<synchronous>, transform_indices = @transform_6, window_bounds = array<i64: 1, 64>}, {pipeline_mode = #tpu.pipeline_mode<synchronous>, transform_indices = @transform_7, window_bounds = array<i64: 64, 32>}, {pipeline_mode = #tpu.pipeline_mode<synchronous>, transform_indices = @transform_8, window_bounds = array<i64: 1, 32>}, {pipeline_mode = #tpu.pipeline_mode<synchronous>, transform_indices = @transform_9, window_bounds = array<i64: 1, 32>}, {pipeline_mode = #tpu.pipeline_mode<synchronous>, transform_indices = @transform_10, window_bounds = array<i64: 1, 32>}, {pipeline_mode = #tpu.pipeline_mode<synchronous>, transform_indices = @transform_11, window_bounds = array<i64: 1, 32>}, {pipeline_mode = #tpu.pipeline_mode<synchronous>, transform_indices = @transform_12, window_bounds = array<i64: 1, 32>}, {transform_indices = @transform_13, window_bounds = array<i64: 1, 8, 32>}]} {
    %c0 = arith.constant 0 : index
    %c0_0 = arith.constant 0 : index
    %c0_1 = arith.constant 0 : index
    %0 = vector.load %arg1[%c0, %c0_0, %c0_1] : memref<1x8x32xf32, #tpu.memory_space<vmem>>, vector<1x8x32xf32>
    %1 = vector.shape_cast %0 : vector<1x8x32xf32> to vector<8x32xf32>
    %2 = arith.truncf %1 : vector<8x32xf32> to vector<8x32xbf16>
    %c0_2 = arith.constant 0 : index
    %c0_3 = arith.constant 0 : index
    %3 = vector.load %arg2[%c0_2, %c0_3] : memref<32x96xbf16, #tpu.memory_space<vmem>>, vector<32x96xbf16>
    %cst = arith.constant dense<0.000000e+00> : vector<8x96xf32>
    %4 = tpu.matmul %2, %3, %cst {dimension_numbers = #tpu.dot_dimension_numbers<[1], [0], [0], [1], [0, 0, 1, 1], [], []>} : vector<8x32xbf16>, vector<32x96xbf16>, vector<8x96xf32> -> vector<8x96xf32>
    %c0_4 = arith.constant 0 : index
    %c0_5 = arith.constant 0 : index
    %5 = vector.load %arg3[%c0_4, %c0_5] : memref<1x96xf32, #tpu.memory_space<vmem>>, vector<1x96xf32>
    %6 = vector.broadcast %5 : vector<1x96xf32> to vector<8x96xf32>
    %7 = arith.addf %4, %6 : vector<8x96xf32>
    %8 = vector.extract_strided_slice %7 {offsets = [0, 0], sizes = [8, 32], strides = [1, 1]} : vector<8x96xf32> to vector<8x32xf32>
    %9 = arith.truncf %8 : vector<8x32xf32> to vector<8x32xbf16>
    %10 = vector.shape_cast %9 : vector<8x32xbf16> to vector<8x4x8xbf16>
    %11 = tpu.transpose %10, [1, 0, 2] : vector<8x4x8xbf16> -> vector<4x8x8xbf16>
    %12 = vector.extract_strided_slice %7 {offsets = [0, 32], sizes = [8, 32], strides = [1, 1]} : vector<8x96xf32> to vector<8x32xf32>
    %13 = arith.truncf %12 : vector<8x32xf32> to vector<8x32xbf16>
    %14 = vector.shape_cast %13 : vector<8x32xbf16> to vector<8x4x8xbf16>
    %15 = tpu.transpose %14, [1, 0, 2] : vector<8x4x8xbf16> -> vector<4x8x8xbf16>
    %16 = vector.extract_strided_slice %7 {offsets = [0, 64], sizes = [8, 32], strides = [1, 1]} : vector<8x96xf32> to vector<8x32xf32>
    %17 = arith.truncf %16 : vector<8x32xf32> to vector<8x32xbf16>
    %18 = vector.shape_cast %17 : vector<8x32xbf16> to vector<8x4x8xbf16>
    %19 = tpu.transpose %18, [1, 0, 2] : vector<8x4x8xbf16> -> vector<4x8x8xbf16>
    "tpu.trace_start"() <{level = 10 : i32, message = "hqe,hke->hqk"}> : () -> ()
    %cst_6 = arith.constant dense<0.000000e+00> : vector<4x8x8xf32>
    %20 = tpu.matmul %11, %15, %cst_6 {dimension_numbers = #tpu.dot_dimension_numbers<[2], [2], [1], [1], [0, 0, 0, 1, 1, 1], [0], [0]>} : vector<4x8x8xbf16>, vector<4x8x8xbf16>, vector<4x8x8xf32> -> vector<4x8x8xf32>
    "tpu.trace_stop"() : () -> ()
    %cst_7 = arith.constant dense<0xFF800000> : vector<4x8xf32>
    %21 = vector.multi_reduction <maximumf>, %20, %cst_7 [2] : vector<4x8x8xf32> to vector<4x8xf32>
    %22 = vector.shape_cast %21 : vector<4x8xf32> to vector<4x8x1xf32>
    %23 = vector.broadcast %22 : vector<4x8x1xf32> to vector<4x8x8xf32>
    %24 = arith.subf %20, %23 : vector<4x8x8xf32>
    %25 = math.exp %24 : vector<4x8x8xf32>
    %cst_8 = arith.constant dense<0.000000e+00> : vector<4x8xf32>
    %26 = vector.multi_reduction <add>, %25, %cst_8 [2] : vector<4x8x8xf32> to vector<4x8xf32>
    %27 = vector.shape_cast %26 : vector<4x8xf32> to vector<4x8x1xf32>
    %28 = tpu.reciprocal %27 {approx = true} : vector<4x8x1xf32> -> vector<4x8x1xf32>
    %29 = vector.broadcast %28 : vector<4x8x1xf32> to vector<4x8x8xf32>
    %30 = arith.mulf %25, %29 : vector<4x8x8xf32>
    %31 = arith.truncf %30 : vector<4x8x8xf32> to vector<4x8x8xbf16>
    "tpu.trace_start"() <{level = 10 : i32, message = "hqk,hke->hqe"}> : () -> ()
    %cst_9 = arith.constant dense<0.000000e+00> : vector<4x8x8xf32>
    %32 = tpu.matmul %31, %19, %cst_9 {dimension_numbers = #tpu.dot_dimension_numbers<[2], [1], [1], [2], [0, 0, 0, 1, 1, 2], [0], [0]>} : vector<4x8x8xbf16>, vector<4x8x8xbf16>, vector<4x8x8xf32> -> vector<4x8x8xf32>
    "tpu.trace_stop"() : () -> ()
    %33 = arith.truncf %32 : vector<4x8x8xf32> to vector<4x8x8xbf16>
    %34 = tpu.transpose %33, [1, 0, 2] : vector<4x8x8xbf16> -> vector<8x4x8xbf16>
    %35 = vector.shape_cast %34 : vector<8x4x8xbf16> to vector<8x32xbf16>
    %c0_10 = arith.constant 0 : index
    %c0_11 = arith.constant 0 : index
    %36 = vector.load %arg4[%c0_10, %c0_11] : memref<32x32xbf16, #tpu.memory_space<vmem>>, vector<32x32xbf16>
    %cst_12 = arith.constant dense<0.000000e+00> : vector<8x32xf32>
    %37 = tpu.matmul %35, %36, %cst_12 {dimension_numbers = #tpu.dot_dimension_numbers<[1], [0], [0], [1], [0, 0, 1, 1], [], []>} : vector<8x32xbf16>, vector<32x32xbf16>, vector<8x32xf32> -> vector<8x32xf32>
    %c0_13 = arith.constant 0 : index
    %c0_14 = arith.constant 0 : index
    %38 = vector.load %arg5[%c0_13, %c0_14] : memref<1x32xf32, #tpu.memory_space<vmem>>, vector<1x32xf32>
    %39 = vector.broadcast %38 : vector<1x32xf32> to vector<8x32xf32>
    %40 = arith.addf %37, %39 : vector<8x32xf32>
    %41 = arith.addf %1, %40 : vector<8x32xf32>
    %c0_15 = arith.constant 0 : index
    %c0_16 = arith.constant 0 : index
    %42 = vector.load %arg10[%c0_15, %c0_16] : memref<1x32xf32, #tpu.memory_space<vmem>>, vector<1x32xf32>
    %c0_17 = arith.constant 0 : index
    %c0_18 = arith.constant 0 : index
    %43 = vector.load %arg11[%c0_17, %c0_18] : memref<1x32xf32, #tpu.memory_space<vmem>>, vector<1x32xf32>
    %cst_19 = arith.constant dense<0.000000e+00> : vector<8xf32>
    %44 = vector.multi_reduction <add>, %41, %cst_19 [1] : vector<8x32xf32> to vector<8xf32>
    %45 = vector.shape_cast %44 : vector<8xf32> to vector<8x1xf32>
    %cst_20 = arith.constant 3.200000e+01 : f32
    %46 = vector.broadcast %cst_20 : f32 to vector<8x1xf32>
    %47 = arith.divf %45, %46 : vector<8x1xf32>
    %48 = vector.broadcast %47 : vector<8x1xf32> to vector<8x32xf32>
    %49 = arith.subf %41, %48 : vector<8x32xf32>
    %50 = arith.mulf %49, %49 : vector<8x32xf32>
    %cst_21 = arith.constant dense<0.000000e+00> : vector<8xf32>
    %51 = vector.multi_reduction <add>, %50, %cst_21 [1] : vector<8x32xf32> to vector<8xf32>
    %52 = vector.shape_cast %51 : vector<8xf32> to vector<8x1xf32>
    %cst_22 = arith.constant 3.200000e+01 : f32
    %53 = vector.broadcast %cst_22 : f32 to vector<8x1xf32>
    %54 = arith.divf %52, %53 : vector<8x1xf32>
    %55 = vector.broadcast %47 : vector<8x1xf32> to vector<8x32xf32>
    %56 = arith.subf %41, %55 : vector<8x32xf32>
    %cst_23 = arith.constant 9.99999997E-7 : f32
    %57 = vector.broadcast %cst_23 : f32 to vector<8x1xf32>
    %58 = arith.addf %54, %57 : vector<8x1xf32>
    %59 = math.rsqrt %58 : vector<8x1xf32>
    %60 = vector.broadcast %59 : vector<8x1xf32> to vector<8x32xf32>
    %61 = arith.mulf %56, %60 : vector<8x32xf32>
    %62 = vector.broadcast %42 : vector<1x32xf32> to vector<8x32xf32>
    %63 = arith.mulf %61, %62 : vector<8x32xf32>
    %64 = vector.broadcast %43 : vector<1x32xf32> to vector<8x32xf32>
    %65 = arith.addf %63, %64 : vector<8x32xf32>
    %66 = arith.truncf %65 : vector<8x32xf32> to vector<8x32xbf16>
    %c0_24 = arith.constant 0 : index
    %c0_25 = arith.constant 0 : index
    %67 = vector.load %arg6[%c0_24, %c0_25] : memref<32x64xbf16, #tpu.memory_space<vmem>>, vector<32x64xbf16>
    %cst_26 = arith.constant dense<0.000000e+00> : vector<8x64xf32>
    %68 = tpu.matmul %66, %67, %cst_26 {dimension_numbers = #tpu.dot_dimension_numbers<[1], [0], [0], [1], [0, 0, 1, 1], [], []>} : vector<8x32xbf16>, vector<32x64xbf16>, vector<8x64xf32> -> vector<8x64xf32>
    %c0_27 = arith.constant 0 : index
    %c0_28 = arith.constant 0 : index
    %69 = vector.load %arg7[%c0_27, %c0_28] : memref<1x64xf32, #tpu.memory_space<vmem>>, vector<1x64xf32>
    %70 = vector.broadcast %69 : vector<1x64xf32> to vector<8x64xf32>
    %71 = arith.addf %68, %70 : vector<8x64xf32>
    %cst_29 = arith.constant 0.000000e+00 : f32
    %72 = vector.broadcast %cst_29 : f32 to vector<8x64xf32>
    %73 = arith.maximumf %71, %72 : vector<8x64xf32>
    %74 = arith.truncf %73 : vector<8x64xf32> to vector<8x64xbf16>
    %c0_30 = arith.constant 0 : index
    %c0_31 = arith.constant 0 : index
    %75 = vector.load %arg8[%c0_30, %c0_31] : memref<64x32xbf16, #tpu.memory_space<vmem>>, vector<64x32xbf16>
    %cst_32 = arith.constant dense<0.000000e+00> : vector<8x32xf32>
    %76 = tpu.matmul %74, %75, %cst_32 {dimension_numbers = #tpu.dot_dimension_numbers<[1], [0], [0], [1], [0, 0, 1, 1], [], []>} : vector<8x64xbf16>, vector<64x32xbf16>, vector<8x32xf32> -> vector<8x32xf32>
    %c0_33 = arith.constant 0 : index
    %c0_34 = arith.constant 0 : index
    %77 = vector.load %arg9[%c0_33, %c0_34] : memref<1x32xf32, #tpu.memory_space<vmem>>, vector<1x32xf32>
    %78 = vector.broadcast %77 : vector<1x32xf32> to vector<8x32xf32>
    %79 = arith.addf %76, %78 : vector<8x32xf32>
    %80 = arith.addf %65, %79 : vector<8x32xf32>
    %c0_35 = arith.constant 0 : index
    %c0_36 = arith.constant 0 : index
    %81 = vector.load %arg12[%c0_35, %c0_36] : memref<1x32xf32, #tpu.memory_space<vmem>>, vector<1x32xf32>
    %c0_37 = arith.constant 0 : index
    %c0_38 = arith.constant 0 : index
    %82 = vector.load %arg13[%c0_37, %c0_38] : memref<1x32xf32, #tpu.memory_space<vmem>>, vector<1x32xf32>
    %cst_39 = arith.constant dense<0.000000e+00> : vector<8xf32>
    %83 = vector.multi_reduction <add>, %80, %cst_39 [1] : vector<8x32xf32> to vector<8xf32>
    %84 = vector.shape_cast %83 : vector<8xf32> to vector<8x1xf32>
    %cst_40 = arith.constant 3.200000e+01 : f32
    %85 = vector.broadcast %cst_40 : f32 to vector<8x1xf32>
    %86 = arith.divf %84, %85 : vector<8x1xf32>
    %87 = vector.broadcast %86 : vector<8x1xf32> to vector<8x32xf32>
    %88 = arith.subf %80, %87 : vector<8x32xf32>
    %89 = arith.mulf %88, %88 : vector<8x32xf32>
    %cst_41 = arith.constant dense<0.000000e+00> : vector<8xf32>
    %90 = vector.multi_reduction <add>, %89, %cst_41 [1] : vector<8x32xf32> to vector<8xf32>
    %91 = vector.shape_cast %90 : vector<8xf32> to vector<8x1xf32>
    %cst_42 = arith.constant 3.200000e+01 : f32
    %92 = vector.broadcast %cst_42 : f32 to vector<8x1xf32>
    %93 = arith.divf %91, %92 : vector<8x1xf32>
    %94 = vector.broadcast %86 : vector<8x1xf32> to vector<8x32xf32>
    %95 = arith.subf %80, %94 : vector<8x32xf32>
    %cst_43 = arith.constant 9.99999997E-7 : f32
    %96 = vector.broadcast %cst_43 : f32 to vector<8x1xf32>
    %97 = arith.addf %93, %96 : vector<8x1xf32>
    %98 = math.rsqrt %97 : vector<8x1xf32>
    %99 = vector.broadcast %98 : vector<8x1xf32> to vector<8x32xf32>
    %100 = arith.mulf %95, %99 : vector<8x32xf32>
    %101 = vector.broadcast %81 : vector<1x32xf32> to vector<8x32xf32>
    %102 = arith.mulf %100, %101 : vector<8x32xf32>
    %103 = vector.broadcast %82 : vector<1x32xf32> to vector<8x32xf32>
    %104 = arith.addf %102, %103 : vector<8x32xf32>
    %c0_44 = arith.constant 0 : index
    %c0_45 = arith.constant 0 : index
    %c0_46 = arith.constant 0 : index
    %105 = vector.load %arg14[%c0_44, %c0_45, %c0_46] : memref<1x8x32xf32, #tpu.memory_space<vmem>>, vector<1x8x32xf32>
    %106 = vector.shape_cast %105 : vector<1x8x32xf32> to vector<8x32xf32>
    %107 = vector.shape_cast %104 : vector<8x32xf32> to vector<1x8x32xf32>
    tpu.vector_store %arg14[%c0_44, %c0_45, %c0_46], %107 {strides = array<i32>} : memref<1x8x32xf32, #tpu.memory_space<vmem>>, vector<1x8x32xf32>,
    return
  }
  func.func @transform_0(%arg0: i32) -> (i32, i32, i32) {
    %c0_i32 = arith.constant 0 : i32
    %c0_i32_0 = arith.constant 0 : i32
    %c0_i32_1 = arith.constant 0 : i32
    return %arg0, %c0_i32, %c0_i32_0 : i32, i32, i32
  }
  func.func @transform_1(%arg0: i32) -> (i32, i32) {
    %c0_i32 = arith.constant 0 : i32
    %c0_i32_0 = arith.constant 0 : i32
    %c0_i32_1 = arith.constant 0 : i32
    return %c0_i32, %c0_i32_0 : i32, i32
  }
  func.func @transform_2(%arg0: i32) -> (i32, i32) {
    %c0_i32 = arith.constant 0 : i32
    %c0_i32_0 = arith.constant 0 : i32
    %c0_i32_1 = arith.constant 0 : i32
    return %c0_i32, %c0_i32_0 : i32, i32
  }
  func.func @transform_3(%arg0: i32) -> (i32, i32) {
    %c0_i32 = arith.constant 0 : i32
    %c0_i32_0 = arith.constant 0 : i32
    %c0_i32_1 = arith.constant 0 : i32
    return %c0_i32, %c0_i32_0 : i32, i32
  }
  func.func @transform_4(%arg0: i32) -> (i32, i32) {
    %c0_i32 = arith.constant 0 : i32
    %c0_i32_0 = arith.constant 0 : i32
    %c0_i32_1 = arith.constant 0 : i32
    return %c0_i32, %c0_i32_0 : i32, i32
  }
  func.func @transform_5(%arg0: i32) -> (i32, i32) {
    %c0_i32 = arith.constant 0 : i32
    %c0_i32_0 = arith.constant 0 : i32
    %c0_i32_1 = arith.constant 0 : i32
    return %c0_i32, %c0_i32_0 : i32, i32
  }
  func.func @transform_6(%arg0: i32) -> (i32, i32) {
    %c0_i32 = arith.constant 0 : i32
    %c0_i32_0 = arith.constant 0 : i32
    %c0_i32_1 = arith.constant 0 : i32
    return %c0_i32, %c0_i32_0 : i32, i32
  }
  func.func @transform_7(%arg0: i32) -> (i32, i32) {
    %c0_i32 = arith.constant 0 : i32
    %c0_i32_0 = arith.constant 0 : i32
    %c0_i32_1 = arith.constant 0 : i32
    return %c0_i32, %c0_i32_0 : i32, i32
  }
  func.func @transform_8(%arg0: i32) -> (i32, i32) {
    %c0_i32 = arith.constant 0 : i32
    %c0_i32_0 = arith.constant 0 : i32
    %c0_i32_1 = arith.constant 0 : i32
    return %c0_i32, %c0_i32_0 : i32, i32
  }
  func.func @transform_9(%arg0: i32) -> (i32, i32) {
    %c0_i32 = arith.constant 0 : i32
    %c0_i32_0 = arith.constant 0 : i32
    %c0_i32_1 = arith.constant 0 : i32
    return %c0_i32, %c0_i32_0 : i32, i32
  }
  func.func @transform_10(%arg0: i32) -> (i32, i32) {
    %c0_i32 = arith.constant 0 : i32
    %c0_i32_0 = arith.constant 0 : i32
    %c0_i32_1 = arith.constant 0 : i32
    return %c0_i32, %c0_i32_0 : i32, i32
  }
  func.func @transform_11(%arg0: i32) -> (i32, i32) {
    %c0_i32 = arith.constant 0 : i32
    %c0_i32_0 = arith.constant 0 : i32
    %c0_i32_1 = arith.constant 0 : i32
    return %c0_i32, %c0_i32_0 : i32, i32
  }
  func.func @transform_12(%arg0: i32) -> (i32, i32) {
    %c0_i32 = arith.constant 0 : i32
    %c0_i32_0 = arith.constant 0 : i32
    %c0_i32_1 = arith.constant 0 : i32
    return %c0_i32, %c0_i32_0 : i32, i32
  }
  func.func @transform_13(%arg0: i32) -> (i32, i32, i32) {
    %c0_i32 = arith.constant 0 : i32
    %c0_i32_0 = arith.constant 0 : i32
    %c0_i32_1 = arith.constant 0 : i32
    return %arg0, %c0_i32, %c0_i32_0 : i32, i32, i32
  }
}

</mosaic_0001>

<llo_original>
// kernel: tpu_custom_call.1
$region0: #{tpu_custom_call.1}
  #allocation0 [shape = 'u32[]', space=smem, size = 0x4, offset = 0x4, fixed_abs, tag = 'smem constant byte address 0x4 - core index']
  #allocation1 [shape = 'u32[144,128]{1,0:T(1,128)}', space=vmem, size = 0x12000, scoped, tag = 'internal scratch']
  %s0 = inlined_call_operand.vmem [shape: f32[2,8,32], index: 0, kind: input, shape index: {}]
  %s1 = inlined_call_operand.vmem [shape: bf16[32,96], index: 1, kind: input, shape index: {}]
  %s2 = inlined_call_operand.vmem [shape: f32[1,96], index: 2, kind: input, shape index: {}]
  %s3 = inlined_call_operand.vmem [shape: bf16[32,32], index: 3, kind: input, shape index: {}]
  %s4 = inlined_call_operand.vmem [shape: f32[1,32], index: 4, kind: input, shape index: {}]
  %s5 = inlined_call_operand.hbm [shape: bf16[32,64], index: 5, kind: input, shape index: {}]
  %s6 = inlined_call_operand.vmem [shape: f32[1,64], index: 6, kind: input, shape index: {}]
  %s7 = inlined_call_operand.vmem [shape: bf16[64,32], index: 7, kind: input, shape index: {}]
  %s8 = inlined_call_operand.vmem [shape: f32[1,32], index: 8, kind: input, shape index: {}]
  %s9 = inlined_call_operand.vmem [shape: f32[1,32], index: 9, kind: input, shape index: {}]
  %s10 = inlined_call_operand.vmem [shape: f32[1,32], index: 10, kind: input, shape index: {}]
  %s11 = inlined_call_operand.vmem [shape: f32[1,32], index: 11, kind: input, shape index: {}]
  %s12 = inlined_call_operand.vmem [shape: f32[1,32], index: 12, kind: input, shape index: {}]
  %s13 = inlined_call_operand.hbm [shape: f32[2,8,32], index: 13, kind: output, shape index: {}]
  %s14 = sld [smem:[#allocation0]]
  $region89: #{tpu_custom_call.1} parent=0
    _
  %s16 = ssub.s32 1, %s14
  %s17 = scalar_select 0, %s16, %s14
  $region1: #{tpu_custom_call.1} parent=0
    #allocation2 [shape = 'u8[8192]{0}', space=vmem, size = 0x2000, scoped, tag = 'input window, operand 5, single buffered']
    #allocation3 [shape = 's32[2]{0}', space=sflag, size = 0x8, scoped, tag = 'scoped memory for tpu_custom_call.1']
    #allocation4 [shape = 's32[2]{0}', space=sflag, size = 0x8, scoped, tag = 'scoped memory for tpu_custom_call.1']
    #allocation5 [shape = 'u8[8192]{0}', space=vmem, size = 0x2000, scoped, tag = 'output window, operand 0']
    %18 = vsyncpa [#allocation3], 0
    %19 = vsyncpa [#allocation4], 0
    %s20 = scalar_lea.sflag [#allocation4], 1
    %21 = vsyncpa %s20, 0
    loop: start=0, step=1, limit=4
    $region2: #{tpu_custom_call.1} parent=1 // loop_pre_header
      _
    $region3: #{tpu_custom_call.1} parent=1 // loop_header
      %s23 = sphi 0, %s27
      %p24 = scmp.ge.s32.totalorder %s23, 4
      %s33 = sphi 0, %s35
      %s36 = sphi 0, %s33
      %s37 = sphi 0, %s36
      %s53 = sphi 0, %s37
      %s57 = sphi 0, %s57
      %s59 = sphi 0, %s57
      %s60 = sphi 0, %s59
      %s74 = sphi 0, %s60
      %s78 = sphi 0, %s78
      %s80 = sphi 0, %s78
      %s81 = sphi 0, %s80
      %s95 = sphi 0, %s81
      %s99 = sphi 0, %s99
      %s101 = sphi 0, %s99
      %s102 = sphi 0, %s101
      %s116 = sphi 0, %s102
      %s120 = sphi 0, %s120
      %s122 = sphi 0, %s120
      %s123 = sphi 0, %s122
      %s137 = sphi 0, %s123
      %s141 = sphi 0, %s141
      %s143 = sphi 0, %s141
      %s144 = sphi 0, %s143
      %s158 = sphi 0, %s144
      %s162 = sphi 0, %s162
      %s164 = sphi 0, %s162
      %s165 = sphi 0, %s164
      %s179 = sphi 0, %s165
      %s183 = sphi 0, %s183
      %s185 = sphi 0, %s183
      %s186 = sphi 0, %s185
      %s200 = sphi 0, %s186
      %s204 = sphi 0, %s204
      %s206 = sphi 0, %s204
      %s207 = sphi 0, %s206
      %s221 = sphi 0, %s207
      %s225 = sphi 0, %s225
      %s227 = sphi 0, %s225
      %s228 = sphi 0, %s227
      %s242 = sphi 0, %s228
      %s246 = sphi 0, %s246
      %s248 = sphi 0, %s246
      %s249 = sphi 0, %s248
      %s263 = sphi 0, %s249
      %s267 = sphi 0, %s267
      %s269 = sphi 0, %s267
      %s270 = sphi 0, %s269
      %s284 = sphi 0, %s270
      %s288 = sphi 0, %s288
      %s290 = sphi 0, %s288
      %s291 = sphi 0, %s290
      %s305 = sphi 0, %s291
      %s311 = sphi 0, %s313
      %s314 = sphi 0, %s311
      %s315 = sphi 0, %s314
      %s331 = sphi 0, %s315
    $region4: #{tpu_custom_call.1} parent=1 // loop_header_branch
      %26 = sbr.rel (%p24) target = $region8
    $region5: #{tpu_custom_call.1} parent=1 // loop_body
      %s28 = ssub.s32 %s23, 1
      %s29 = ssub.s32 %s23, 2
      %s30 = sadd.s32 %s23, 1
      %s31 = ssub.s32 %s23, %s30
      %p32 = scmp.eq.s32.totalorder %s31, 0
      %s34 = sadd.s32 %s33, 1
      %s35 = scalar_select %p32, %s33, %s34
      %p38 = pneg %p32
      %p39 = scmp.eq.s32.totalorder %s23, 1
      %p40 = por %p38, %p39
      %p41 = scmp.ne.s32.totalorder %s33, %s36
      %p42 = scmp.eq.s32.totalorder %s23, 0
      %p43 = por %p41, %p42
      %p44 = scmp.ne.s32.totalorder %s33, %s36
      %p45 = scmp.eq.s32.totalorder %s28, 1
      %p46 = por %p44, %p45
      %p47 = scmp.ne.s32.totalorder %s36, %s37
      %p48 = scmp.eq.s32.totalorder %s28, 0
      %p49 = por %p47, %p48
      %p50 = scmp.ne.s32.totalorder %s36, %s37
      %p51 = scmp.eq.s32.totalorder %s29, 1
      %p52 = por %p50, %p51
      %p54 = scmp.ne.s32.totalorder %s37, %s53
      %p55 = scmp.eq.s32.totalorder %s29, 0
      %p56 = por %p54, %p55
      %s58 = sadd.s32 %s57, 1
      %p61 = scmp.eq.s32.totalorder %s23, 1
      %p62 = scmp.ne.s32.totalorder %s57, %s59
      %p63 = scmp.eq.s32.totalorder %s23, 0
      %p64 = por %p62, %p63
      %p65 = scmp.ne.s32.totalorder %s57, %s59
      %p66 = scmp.eq.s32.totalorder %s28, 1
      %p67 = por %p65, %p66
      %p68 = scmp.ne.s32.totalorder %s59, %s60
      %p69 = scmp.eq.s32.totalorder %s28, 0
      %p70 = por %p68, %p69
      %p71 = scmp.ne.s32.totalorder %s59, %s60
      %p72 = scmp.eq.s32.totalorder %s29, 1
      %p73 = por %p71, %p72
      %p75 = scmp.ne.s32.totalorder %s60, %s74
      %p76 = scmp.eq.s32.totalorder %s29, 0
      %p77 = por %p75, %p76
      %s79 = sadd.s32 %s78, 1
      %p82 = scmp.eq.s32.totalorder %s23, 1
      %p83 = scmp.ne.s32.totalorder %s78, %s80
      %p84 = scmp.eq.s32.totalorder %s23, 0
      %p85 = por %p83, %p84
      %p86 = scmp.ne.s32.totalorder %s78, %s80
      %p87 = scmp.eq.s32.totalorder %s28, 1
      %p88 = por %p86, %p87
      %p89 = scmp.ne.s32.totalorder %s80, %s81
      %p90 = scmp.eq.s32.totalorder %s28, 0
      %p91 = por %p89, %p90
      %p92 = scmp.ne.s32.totalorder %s80, %s81
      %p93 = scmp.eq.s32.totalorder %s29, 1
      %p94 = por %p92, %p93
      %p96 = scmp.ne.s32.totalorder %s81, %s95
      %p97 = scmp.eq.s32.totalorder %s29, 0
      %p98 = por %p96, %p97
      %s100 = sadd.s32 %s99, 1
      %p103 = scmp.eq.s32.totalorder %s23, 1
      %p104 = scmp.ne.s32.totalorder %s99, %s101
      %p105 = scmp.eq.s32.totalorder %s23, 0
      %p106 = por %p104, %p105
      %p107 = scmp.ne.s32.totalorder %s99, %s101
      %p108 = scmp.eq.s32.totalorder %s28, 1
      %p109 = por %p107, %p108
      %p110 = scmp.ne.s32.totalorder %s101, %s102
      %p111 = scmp.eq.s32.totalorder %s28, 0
      %p112 = por %p110, %p111
      %p113 = scmp.ne.s32.totalorder %s101, %s102
      %p114 = scmp.eq.s32.totalorder %s29, 1
      %p115 = por %p113, %p114
      %p117 = scmp.ne.s32.totalorder %s102, %s116
      %p118 = scmp.eq.s32.totalorder %s29, 0
      %p119 = por %p117, %p118
      %s121 = sadd.s32 %s120, 1
      %p124 = scmp.eq.s32.totalorder %s23, 1
      %p125 = scmp.ne.s32.totalorder %s120, %s122
      %p126 = scmp.eq.s32.totalorder %s23, 0
      %p127 = por %p125, %p126
      %p128 = scmp.ne.s32.totalorder %s120, %s122
      %p129 = scmp.eq.s32.totalorder %s28, 1
      %p130 = por %p128, %p129
      %p131 = scmp.ne.s32.totalorder %s122, %s123
      %p132 = scmp.eq.s32.totalorder %s28, 0
      %p133 = por %p131, %p132
      %p134 = scmp.ne.s32.totalorder %s122, %s123
      %p135 = scmp.eq.s32.totalorder %s29, 1
      %p136 = por %p134, %p135
      %p138 = scmp.ne.s32.totalorder %s123, %s137
      %p139 = scmp.eq.s32.totalorder %s29, 0
      %p140 = por %p138, %p139
      %s142 = sadd.s32 %s141, 1
      %p145 = scmp.eq.s32.totalorder %s23, 1
      %p146 = scmp.ne.s32.totalorder %s141, %s143
      %p147 = scmp.eq.s32.totalorder %s23, 0
      %p148 = por %p146, %p147
      %p149 = scmp.ne.s32.totalorder %s141, %s143
      %p150 = scmp.eq.s32.totalorder %s28, 1
      %p151 = por %p149, %p150
      %p152 = scmp.ne.s32.totalorder %s143, %s144
      %p153 = scmp.eq.s32.totalorder %s28, 0
      %p154 = por %p152, %p153
      %p155 = scmp.ne.s32.totalorder %s143, %s144
      %p156 = scmp.eq.s32.totalorder %s29, 1
      %p157 = por %p155, %p156
      %p159 = scmp.ne.s32.totalorder %s144, %s158
      %p160 = scmp.eq.s32.totalorder %s29, 0
      %p161 = por %p159, %p160
      %s163 = sadd.s32 %s162, 1
      %p166 = scmp.eq.s32.totalorder %s23, 1
      %p167 = scmp.ne.s32.totalorder %s162, %s164
      %p168 = scmp.eq.s32.totalorder %s23, 0
      %p169 = por %p167, %p168
      %p170 = scmp.ne.s32.totalorder %s162, %s164
      %p171 = scmp.eq.s32.totalorder %s28, 1
      %p172 = por %p170, %p171
      %p173 = scmp.ne.s32.totalorder %s164, %s165
      %p174 = scmp.eq.s32.totalorder %s28, 0
      %p175 = por %p173, %p174
      %p176 = scmp.ne.s32.totalorder %s164, %s165
      %p177 = scmp.eq.s32.totalorder %s29, 1
      %p178 = por %p176, %p177
      %p180 = scmp.ne.s32.totalorder %s165, %s179
      %p181 = scmp.eq.s32.totalorder %s29, 0
      %p182 = por %p180, %p181
      %s184 = sadd.s32 %s183, 1
      %p187 = scmp.eq.s32.totalorder %s23, 1
      %p188 = scmp.ne.s32.totalorder %s183, %s185
      %p189 = scmp.eq.s32.totalorder %s23, 0
      %p190 = por %p188, %p189
      %p191 = scmp.ne.s32.totalorder %s183, %s185
      %p192 = scmp.eq.s32.totalorder %s28, 1
      %p193 = por %p191, %p192
      %p194 = scmp.ne.s32.totalorder %s185, %s186
      %p195 = scmp.eq.s32.totalorder %s28, 0
      %p196 = por %p194, %p195
      %p197 = scmp.ne.s32.totalorder %s185, %s186
      %p198 = scmp.eq.s32.totalorder %s29, 1
      %p199 = por %p197, %p198
      %p201 = scmp.ne.s32.totalorder %s186, %s200
      %p202 = scmp.eq.s32.totalorder %s29, 0
      %p203 = por %p201, %p202
      %s205 = sadd.s32 %s204, 1
      %p208 = scmp.eq.s32.totalorder %s23, 1
      %p209 = scmp.ne.s32.totalorder %s204, %s206
      %p210 = scmp.eq.s32.totalorder %s23, 0
      %p211 = por %p209, %p210
      %p212 = scmp.ne.s32.totalorder %s204, %s206
      %p213 = scmp.eq.s32.totalorder %s28, 1
      %p214 = por %p212, %p213
      %p215 = scmp.ne.s32.totalorder %s206, %s207
      %p216 = scmp.eq.s32.totalorder %s28, 0
      %p217 = por %p215, %p216
      %p218 = scmp.ne.s32.totalorder %s206, %s207
      %p219 = scmp.eq.s32.totalorder %s29, 1
      %p220 = por %p218, %p219
      %p222 = scmp.ne.s32.totalorder %s207, %s221
      %p223 = scmp.eq.s32.totalorder %s29, 0
      %p224 = por %p222, %p223
      %s226 = sadd.s32 %s225, 1
      %p229 = scmp.eq.s32.totalorder %s23, 1
      %p230 = scmp.ne.s32.totalorder %s225, %s227
      %p231 = scmp.eq.s32.totalorder %s23, 0
      %p232 = por %p230, %p231
      %p233 = scmp.ne.s32.totalorder %s225, %s227
      %p234 = scmp.eq.s32.totalorder %s28, 1
      %p235 = por %p233, %p234
      %p236 = scmp.ne.s32.totalorder %s227, %s228
      %p237 = scmp.eq.s32.totalorder %s28, 0
      %p238 = por %p236, %p237
      %p239 = scmp.ne.s32.totalorder %s227, %s228
      %p240 = scmp.eq.s32.totalorder %s29, 1
      %p241 = por %p239, %p240
      %p243 = scmp.ne.s32.totalorder %s228, %s242
      %p244 = scmp.eq.s32.totalorder %s29, 0
      %p245 = por %p243, %p244
      %s247 = sadd.s32 %s246, 1
      %p250 = scmp.eq.s32.totalorder %s23, 1
      %p251 = scmp.ne.s32.totalorder %s246, %s248
      %p252 = scmp.eq.s32.totalorder %s23, 0
      %p253 = por %p251, %p252
      %p254 = scmp.ne.s32.totalorder %s246, %s248
      %p255 = scmp.eq.s32.totalorder %s28, 1
      %p256 = por %p254, %p255
      %p257 = scmp.ne.s32.totalorder %s248, %s249
      %p258 = scmp.eq.s32.totalorder %s28, 0
      %p259 = por %p257, %p258
      %p260 = scmp.ne.s32.totalorder %s248, %s249
      %p261 = scmp.eq.s32.totalorder %s29, 1
      %p262 = por %p260, %p261
      %p264 = scmp.ne.s32.totalorder %s249, %s263
      %p265 = scmp.eq.s32.totalorder %s29, 0
      %p266 = por %p264, %p265
      %s268 = sadd.s32 %s267, 1
      %p271 = scmp.eq.s32.totalorder %s23, 1
      %p272 = scmp.ne.s32.totalorder %s267, %s269
      %p273 = scmp.eq.s32.totalorder %s23, 0
      %p274 = por %p272, %p273
      %p275 = scmp.ne.s32.totalorder %s267, %s269
      %p276 = scmp.eq.s32.totalorder %s28, 1
      %p277 = por %p275, %p276
      %p278 = scmp.ne.s32.totalorder %s269, %s270
      %p279 = scmp.eq.s32.totalorder %s28, 0
      %p280 = por %p278, %p279
      %p281 = scmp.ne.s32.totalorder %s269, %s270
      %p282 = scmp.eq.s32.totalorder %s29, 1
      %p283 = por %p281, %p282
      %p285 = scmp.ne.s32.totalorder %s270, %s284
      %p286 = scmp.eq.s32.totalorder %s29, 0
      %p287 = por %p285, %p286
      %s289 = sadd.s32 %s288, 1
      %p292 = scmp.eq.s32.totalorder %s23, 1
      %p293 = scmp.ne.s32.totalorder %s288, %s290
      %p294 = scmp.eq.s32.totalorder %s23, 0
      %p295 = por %p293, %p294
      %p296 = scmp.ne.s32.totalorder %s288, %s290
      %p297 = scmp.eq.s32.totalorder %s28, 1
      %p298 = por %p296, %p297
      %p299 = scmp.ne.s32.totalorder %s290, %s291
      %p300 = scmp.eq.s32.totalorder %s28, 0
      %p301 = por %p299, %p300
      %p302 = scmp.ne.s32.totalorder %s290, %s291
      %p303 = scmp.eq.s32.totalorder %s29, 1
      %p304 = por %p302, %p303
      %p306 = scmp.ne.s32.totalorder %s291, %s305
      %p307 = scmp.eq.s32.totalorder %s29, 0
      %p308 = por %p306, %p307
      %s309 = ssub.s32 %s23, %s30
      %p310 = scmp.eq.s32.totalorder %s309, 0
      %s312 = sadd.s32 %s311, 1
      %s313 = scalar_select %p310, %s311, %s312
      %p316 = pneg %p310
      %p317 = scmp.eq.s32.totalorder %s23, 1
      %p318 = por %p316, %p317
      %p319 = scmp.ne.s32.totalorder %s311, %s314
      %p320 = scmp.eq.s32.totalorder %s23, 0
      %p321 = por %p319, %p320
      %p322 = scmp.ne.s32.totalorder %s311, %s314
      %p323 = scmp.eq.s32.totalorder %s28, 1
      %p324 = por %p322, %p323
      %p325 = scmp.ne.s32.totalorder %s314, %s315
      %p326 = scmp.eq.s32.totalorder %s28, 0
      %p327 = por %p325, %p326
      %p328 = scmp.ne.s32.totalorder %s314, %s315
      %p329 = scmp.eq.s32.totalorder %s29, 1
      %p330 = por %p328, %p329
      %p332 = scmp.ne.s32.totalorder %s315, %s331
      %p333 = scmp.eq.s32.totalorder %s29, 0
      %p334 = por %p332, %p333
      %p335 = scmp.le.s32.totalorder 1, %s23
      %p336 = scmp.lt.s32.totalorder %s23, 3
      %p337 = pnand %p335, %p336
      %p338 = pneg %p337
      // Predicated region
      $region9: #{tpu_custom_call.1} parent=5 // pred_check
        _
      $region10: #{tpu_custom_call.1} parent=5 // pred_check_branch
        %340 = sbr.rel (%p337) target = $region12
      $region11: #{tpu_custom_call.1} parent=5 // pred_region
        %s341 = ssub.s32 %s23, 1
        // Predicated region
        $region13: #{tpu_custom_call.1} parent=11 // pred_check
          %p342 = pneg %p70
        $region14: #{tpu_custom_call.1} parent=11 // pred_check_branch
          %344 = sbr.rel (%p342) target = $region16
        $region15: #{tpu_custom_call.1} parent=11 // pred_region
          _
        $region16: #{tpu_custom_call.1} parent=11 // pred_fallthru
          _
        // Predicated region
        $region17: #{tpu_custom_call.1} parent=11 // pred_check
          %p345 = pneg %p91
        $region18: #{tpu_custom_call.1} parent=11 // pred_check_branch
          %347 = sbr.rel (%p345) target = $region20
        $region19: #{tpu_custom_call.1} parent=11 // pred_region
          _
        $region20: #{tpu_custom_call.1} parent=11 // pred_fallthru
          _
        // Predicated region
        $region21: #{tpu_custom_call.1} parent=11 // pred_check
          %p348 = pneg %p112
        $region22: #{tpu_custom_call.1} parent=11 // pred_check_branch
          %350 = sbr.rel (%p348) target = $region24
        $region23: #{tpu_custom_call.1} parent=11 // pred_region
          _
        $region24: #{tpu_custom_call.1} parent=11 // pred_fallthru
          _
        // Predicated region
        $region25: #{tpu_custom_call.1} parent=11 // pred_check
          %p351 = pneg %p133
        $region26: #{tpu_custom_call.1} parent=11 // pred_check_branch
          %353 = sbr.rel (%p351) target = $region28
        $region27: #{tpu_custom_call.1} parent=11 // pred_region
          _
        $region28: #{tpu_custom_call.1} parent=11 // pred_fallthru
          _
        // Predicated region
        $region29: #{tpu_custom_call.1} parent=11 // pred_check
          %p354 = pneg %p154
        $region30: #{tpu_custom_call.1} parent=11 // pred_check_branch
          %356 = sbr.rel (%p354) target = $region32
        $region31: #{tpu_custom_call.1} parent=11 // pred_region
          %s358 = ssub.s32 256, 256
          %359 = vsyncadd [#allocation3], %s358
          %s360 = sshll.u32 [#allocation2], 4
          %s361 = int_to_ptr.vmem [resolvable:$true] %s360
          %366 = dma.hbm_to_vmem [thread:$0]  %s5, 256, %s361, [#allocation3], 64, 64, 4
        $region32: #{tpu_custom_call.1} parent=11 // pred_fallthru
          _
        // Predicated region
        $region33: #{tpu_custom_call.1} parent=11 // pred_check
          %p367 = pneg %p175
        $region34: #{tpu_custom_call.1} parent=11 // pred_check_branch
          %369 = sbr.rel (%p367) target = $region36
        $region35: #{tpu_custom_call.1} parent=11 // pred_region
          _
        $region36: #{tpu_custom_call.1} parent=11 // pred_fallthru
          _
        // Predicated region
        $region37: #{tpu_custom_call.1} parent=11 // pred_check
          %p370 = pneg %p196
        $region38: #{tpu_custom_call.1} parent=11 // pred_check_branch
          %372 = sbr.rel (%p370) target = $region40
        $region39: #{tpu_custom_call.1} parent=11 // pred_region
          _
        $region40: #{tpu_custom_call.1} parent=11 // pred_fallthru
          _
        // Predicated region
        $region41: #{tpu_custom_call.1} parent=11 // pred_check
          %p373 = pneg %p217
        $region42: #{tpu_custom_call.1} parent=11 // pred_check_branch
          %375 = sbr.rel (%p373) target = $region44
        $region43: #{tpu_custom_call.1} parent=11 // pred_region
          _
        $region44: #{tpu_custom_call.1} parent=11 // pred_fallthru
          _
        // Predicated region
        $region45: #{tpu_custom_call.1} parent=11 // pred_check
          %p376 = pneg %p238
        $region46: #{tpu_custom_call.1} parent=11 // pred_check_branch
          %378 = sbr.rel (%p376) target = $region48
        $region47: #{tpu_custom_call.1} parent=11 // pred_region
          _
        $region48: #{tpu_custom_call.1} parent=11 // pred_fallthru
          _
        // Predicated region
        $region49: #{tpu_custom_call.1} parent=11 // pred_check
          %p379 = pneg %p259
        $region50: #{tpu_custom_call.1} parent=11 // pred_check_branch
          %381 = sbr.rel (%p379) target = $region52
        $region51: #{tpu_custom_call.1} parent=11 // pred_region
          _
        $region52: #{tpu_custom_call.1} parent=11 // pred_fallthru
          _
        // Predicated region
        $region53: #{tpu_custom_call.1} parent=11 // pred_check
          %p382 = pneg %p280
        $region54: #{tpu_custom_call.1} parent=11 // pred_check_branch
          %384 = sbr.rel (%p382) target = $region56
        $region55: #{tpu_custom_call.1} parent=11 // pred_region
          _
        $region56: #{tpu_custom_call.1} parent=11 // pred_fallthru
          _
        // Predicated region
        $region57: #{tpu_custom_call.1} parent=11 // pred_check
          %p385 = pneg %p301
        $region58: #{tpu_custom_call.1} parent=11 // pred_check_branch
          %387 = sbr.rel (%p385) target = $region60
        $region59: #{tpu_custom_call.1} parent=11 // pred_region
          _
        $region60: #{tpu_custom_call.1} parent=11 // pred_fallthru
          _
      $region12: #{tpu_custom_call.1} parent=5 // pred_fallthru
        _
      %p388 = scmp.lt.s32.totalorder %s23, 2
      // Predicated region
      $region61: #{tpu_custom_call.1} parent=5 // pred_check
        %p389 = pneg %p388
      $region62: #{tpu_custom_call.1} parent=5 // pred_check_branch
        %391 = sbr.rel (%p389) target = $region64
      $region63: #{tpu_custom_call.1} parent=5 // pred_region
        // Predicated region
        $region65: #{tpu_custom_call.1} parent=63 // pred_check
          %p392 = pneg %p43
        $region66: #{tpu_custom_call.1} parent=63 // pred_check_branch
          %394 = sbr.rel (%p392) target = $region68
        $region67: #{tpu_custom_call.1} parent=63 // pred_region
          %p395 = scmp.lt.s32.totalorder %s23, 1
          %s396 = scalar_select %p395, %s23, 1
          %s397 = smul.addr %s396, 8
          %s398 = scalar_lea.vmem %s0, %s397
        $region68: #{tpu_custom_call.1} parent=63 // pred_fallthru
          _
      $region64: #{tpu_custom_call.1} parent=5 // pred_fallthru
        _
      %p399 = scmp.le.s32.totalorder 1, %s23
      %p400 = scmp.lt.s32.totalorder %s23, 3
      %p401 = pnand %p399, %p400
      %p402 = pneg %p401
      // Predicated region
      $region69: #{tpu_custom_call.1} parent=5 // pred_check
        _
      $region70: #{tpu_custom_call.1} parent=5 // pred_check_branch
        %404 = sbr.rel (%p401) target = $region72
      $region71: #{tpu_custom_call.1} parent=5 // pred_region
        %s405 = ssub.s32 %s23, 1
        // Predicated region
        $region73: #{tpu_custom_call.1} parent=71 // pred_check
          %p406 = pneg %p154
        $region74: #{tpu_custom_call.1} parent=71 // pred_check_branch
          %408 = sbr.rel (%p406) target = $region76
        $region75: #{tpu_custom_call.1} parent=71 // pred_region
          %409 = dma.done [#allocation3], 256
        $region76: #{tpu_custom_call.1} parent=71 // pred_fallthru
          _
        %p410 = scmp.lt.s32.totalorder %s28, 1
        %s411 = scalar_select %p410, %s28, 1
        %s412 = smul.addr %s411, 8
        %s413 = scalar_lea.vmem %s0, %s412
        %p414 = pneg %p49
        %p415 = pneg %p46
        %p416 = pneg %p70
        %p417 = pneg %p67
        %p418 = pneg %p91
        %p419 = pneg %p88
        %p420 = pneg %p112
        %p421 = pneg %p109
        %p422 = pneg %p133
        %p423 = pneg %p130
        %p424 = pneg %p154
        %p425 = pneg %p151
        %p426 = pneg %p175
        %p427 = pneg %p172
        %p428 = pneg %p196
        %p429 = pneg %p193
        %p430 = pneg %p217
        %p431 = pneg %p214
        %p432 = pneg %p238
        %p433 = pneg %p235
        %p434 = pneg %p259
        %p435 = pneg %p256
        %p436 = pneg %p280
        %p437 = pneg %p277
        %p438 = pneg %p301
        %p439 = pneg %p298
        %p440 = pneg %p327
        %p441 = pneg %p324
        %s442 = sand.u32 %s314, 1
        %s443 = scalar_lea.sflag [#allocation4], %s442
        %s444 = sand.u32 %s314, 1
        %s445 = smul.addr %s444, 8
        %s446 = scalar_lea.vmem [#allocation5], %s445
        %p447 = scmp.lt.s32.totalorder %s28, 1
        %s448 = scalar_select %p447, %s28, 1
        %s449 = smul.addr %s448, 8
        %s450 = scalar_lea.vmem %s0, %s449
        %v452 = vld [vmem:[%s450] sm:$0xff]
        %v453 = vpack.c.bf16 %v452, %v452
        %v454 = vld [vmem:[%s1] sm:$0xf]
        %v455 = vld [vmem:[%s1 + $0x4] sm:$0xf]
        %v456 = vld [vmem:[%s1 + $0x8] sm:$0xf]
        %v457 = vld [vmem:[%s1 + $0xc] sm:$0xf]
        %v458 = vld [vmem:[%s2] sm:$0x1]
        %v460 = vlaneseq
        %v461 = vshrl.u32 %v460, 7
        %v462 = vsub.s32 0, %v461
        %v463 = vrot.slane %v458, %v462
        %v469 = vunpack.c.l.b16 %v454
        %v470 = vunpack.c.l.b16 %v455
        %v471 = vunpack.c.l.b16 %v456
        %v472 = vunpack.c.l.b16 %v457
        %v473 = vpack.c.b16 %v470, %v469
        %v474 = vpack.c.b16 %v472, %v471
        %vm477 = vcmask 261120
        %v479 = vsel %vm477, %v453, 0
        %481 = vmatprep.subr.bf16.mxu0 0
        %482 = vmatpush1.bf16.msra.mxu0 %v473
        %483 = vmatprep.subr.bf16.mxu0 0
        %484 = vmatpush1.bf16.msra.mxu0 %v474
        %485 = vmatprep.subr.bf16.mxu0 0
        %486 = vmatpush1.bf16.msra.mxu0 0
        %487 = vmatprep.subr.bf16.mxu0 0
        %488 = vmatpush1.bf16.msra.mxu0 0
        %489 = vmatprep.subr.bf16.mxu0 0
        %490 = vmatpush1.bf16.msra.mxu0 0
        %491 = vmatprep.subr.bf16.mxu0 0
        %492 = vmatpush1.bf16.msra.mxu0 0
        %493 = vmatprep.subr.bf16.mxu0 0
        %494 = vmatpush1.bf16.msra.mxu0 0
        %495 = vmatprep.subr.bf16.mxu0 0
        %496 = vmatpush1.bf16.msra.mxu0 0
        %497 = vmatprep.subr.bf16.mxu0 0
        %498 = vmatpush1.bf16.msra.mxu0 0
        %499 = vmatprep.subr.bf16.mxu0 0
        %500 = vmatpush1.bf16.msra.mxu0 0
        %501 = vmatprep.subr.bf16.mxu0 0
        %502 = vmatpush1.bf16.msra.mxu0 0
        %503 = vmatprep.subr.bf16.mxu0 0
        %504 = vmatpush1.bf16.msra.mxu0 0
        %505 = vmatprep.subr.bf16.mxu0 0
        %506 = vmatpush1.bf16.msra.mxu0 0
        %507 = vmatprep.subr.bf16.mxu0 0
        %508 = vmatpush1.bf16.msra.mxu0 0
        %509 = vmatprep.subr.bf16.mxu0 0
        %510 = vmatpush1.bf16.msra.mxu0 0
        %511 = vmatprep.subr.bf16.mxu0 0
        %512 = vmatpush1.bf16.msra.mxu0 0
        %513 = vmatprep.mubr.bf16.mxu0 0
        %514 = vmatmul.mubr.bf16.gmra.mrb[0].mxu0 %v479
        %v515 = vpop.f32.mrb[0].mxu0
        %v516 = vadd.f32 %v463, %v515
        %v517 = vpop.f32.mrb[0].mxu0
        %v518 = vpop.f32.mrb[0].mxu0
        %v519 = vpop.f32.mrb[0].mxu0
        %520 = vdwg.mxu0
        %v521 = vpack.c.bf16 %v516, %v516
        %523 = vrot.lane.b32.xlu0 %v521, 120
        %v524 = vpop.permute.xlu0 %523
        %525 = vrot.lane.b32.xlu0 %v521, 112
        %v526 = vpop.permute.xlu0 %525
        %527 = vrot.lane.b32.xlu0 %v521, 104
        %v528 = vpop.permute.xlu0 %527
        %v530 = vunpack.c.l.s4 1983009808
        %v531 = vunpack.c.0.s8 %v530
        %v532 = vlaneseq
        %v533 = vshrl.u32 %v532, 7
        %v534 = vsub.s32 %v531, %v533
        %v535 = vrot.slane %v521, %v534
        %v538 = vunpack.c.l.s4 1983009808
        %v539 = vunpack.c.0.s8 %v538
        %v540 = vlaneseq
        %v541 = vshrl.u32 %v540, 7
        %v542 = vsub.s32 %v539, %v541
        %v543 = vrot.slane %v526, %v542
        %v544 = vcombine.low %v535, %v543
        %v545 = vcombine.high %v535, %v543
        %v547 = vunpack.c.l.s4 1934713408
        %v548 = vunpack.c.0.s8 %v547
        %v549 = vlaneseq
        %v550 = vshrl.u32 %v549, 7
        %v551 = vsub.s32 %v548, %v550
        %v552 = vrot.slane %v544, %v551
        %v554 = vunpack.c.l.s4 1934713408
        %v555 = vunpack.c.0.s8 %v554
        %v556 = vlaneseq
        %v557 = vshrl.u32 %v556, 7
        %v558 = vsub.s32 %v555, %v557
        %v559 = vrot.slane %v545, %v558
        %v560 = vcombine.high %v552, 0
        %v561 = vcombine.high %v559, 0
        %v564 = vunpack.c.l.s4 1983009808
        %v565 = vunpack.c.0.s8 %v564
        %v566 = vlaneseq
        %v567 = vshrl.u32 %v566, 7
        %v568 = vsub.s32 %v565, %v567
        %v569 = vrot.slane %v524, %v568
        %v572 = vunpack.c.l.s4 1983009808
        %v573 = vunpack.c.0.s8 %v572
        %v574 = vlaneseq
        %v575 = vshrl.u32 %v574, 7
        %v576 = vsub.s32 %v573, %v575
        %v577 = vrot.slane %v528, %v576
        %v578 = vcombine.low %v569, %v577
        %v579 = vcombine.high %v569, %v577
        %v581 = vunpack.c.l.s4 1934713408
        %v582 = vunpack.c.0.s8 %v581
        %v583 = vlaneseq
        %v584 = vshrl.u32 %v583, 7
        %v585 = vsub.s32 %v582, %v584
        %v586 = vrot.slane %v578, %v585
        %v588 = vunpack.c.l.s4 1934713408
        %v589 = vunpack.c.0.s8 %v588
        %v590 = vlaneseq
        %v591 = vshrl.u32 %v590, 7
        %v592 = vsub.s32 %v589, %v591
        %v593 = vrot.slane %v579, %v592
        %v594 = vcombine.high %v586, 0
        %v595 = vcombine.high %v593, 0
        %v598 = vpack.i.b16 %v586, %v552
        %v600 = vshrl.u32 %v552, 16
        %v601 = vshrl.u32 %v586, 16
        %v602 = vpack.i.b16 %v601, %v600
        %v606 = vpack.i.b16 %v594, %v560
        %v608 = vshrl.u32 %v560, 16
        %v609 = vshrl.u32 %v594, 16
        %v610 = vpack.i.b16 %v609, %v608
        %v614 = vpack.i.b16 %v593, %v559
        %v616 = vshrl.u32 %v559, 16
        %v617 = vshrl.u32 %v593, 16
        %v618 = vpack.i.b16 %v617, %v616
        %v622 = vpack.i.b16 %v595, %v561
        %v624 = vshrl.u32 %v561, 16
        %v625 = vshrl.u32 %v595, 16
        %v626 = vpack.i.b16 %v625, %v624
        %v628 = vcombine.low %v598, %v614
        %v630 = vunpack.c.l.s4 1983009808
        %v631 = vunpack.c.0.s8 %v630
        %v632 = vlaneseq
        %v633 = vshrl.u32 %v632, 7
        %v634 = vsub.s32 %v631, %v633
        %v635 = vrot.slane %v628, %v634
        %v636 = vcombine.low %v606, %v622
        %v638 = vunpack.c.l.s4 1983009808
        %v639 = vunpack.c.0.s8 %v638
        %v640 = vlaneseq
        %v641 = vshrl.u32 %v640, 7
        %v642 = vsub.s32 %v639, %v641
        %v643 = vrot.slane %v636, %v642
        %v644 = vcombine.low %v635, %v643
        %v646 = vunpack.c.l.s4 1934713408
        %v647 = vunpack.c.0.s8 %v646
        %v648 = vlaneseq
        %v649 = vshrl.u32 %v648, 7
        %v650 = vsub.s32 %v647, %v649
        %v651 = vrot.slane %v644, %v650
        %v652 = vcombine.high %v651, 0
        %v653 = vcombine.low %v602, %v618
        %v655 = vunpack.c.l.s4 1983009808
        %v656 = vunpack.c.0.s8 %v655
        %v657 = vlaneseq
        %v658 = vshrl.u32 %v657, 7
        %v659 = vsub.s32 %v656, %v658
        %v660 = vrot.slane %v653, %v659
        %v661 = vcombine.low %v610, %v626
        %v663 = vunpack.c.l.s4 1983009808
        %v664 = vunpack.c.0.s8 %v663
        %v665 = vlaneseq
        %v666 = vshrl.u32 %v665, 7
        %v667 = vsub.s32 %v664, %v666
        %v668 = vrot.slane %v661, %v667
        %v669 = vcombine.low %v660, %v668
        %v671 = vunpack.c.l.s4 1934713408
        %v672 = vunpack.c.0.s8 %v671
        %v673 = vlaneseq
        %v674 = vshrl.u32 %v673, 7
        %v675 = vsub.s32 %v672, %v674
        %v676 = vrot.slane %v669, %v675
        %v677 = vcombine.high %v676, 0
        %v680 = vpack.i.b16 %v676, %v651
        %v681 = vshrl.u32 %v651, 16
        %v682 = vshrl.u32 %v676, 16
        %v683 = vpack.i.b16 %v682, %v681
        %v686 = vpack.i.b16 %v677, %v652
        %v687 = vshrl.u32 %v652, 16
        %v688 = vshrl.u32 %v677, 16
        %v689 = vpack.i.b16 %v688, %v687
        %690 = vrot.lane.b32.xlu0 %v521, 96
        %v691 = vpop.permute.xlu0 %690
        %692 = vrot.lane.b32.xlu0 %v524, 96
        %v693 = vpop.permute.xlu0 %692
        %694 = vrot.lane.b32.xlu0 %v526, 96
        %v695 = vpop.permute.xlu0 %694
        %696 = vrot.lane.b32.xlu0 %v528, 96
        %v697 = vpop.permute.xlu0 %696
        %v700 = vunpack.c.l.s4 1983009808
        %v701 = vunpack.c.0.s8 %v700
        %v702 = vlaneseq
        %v703 = vshrl.u32 %v702, 7
        %v704 = vsub.s32 %v701, %v703
        %v705 = vrot.slane %v691, %v704
        %v708 = vunpack.c.l.s4 1983009808
        %v709 = vunpack.c.0.s8 %v708
        %v710 = vlaneseq
        %v711 = vshrl.u32 %v710, 7
        %v712 = vsub.s32 %v709, %v711
        %v713 = vrot.slane %v695, %v712
        %v714 = vcombine.low %v705, %v713
        %v715 = vcombine.high %v705, %v713
        %v717 = vunpack.c.l.s4 1934713408
        %v718 = vunpack.c.0.s8 %v717
        %v719 = vlaneseq
        %v720 = vshrl.u32 %v719, 7
        %v721 = vsub.s32 %v718, %v720
        %v722 = vrot.slane %v714, %v721
        %v724 = vunpack.c.l.s4 1934713408
        %v725 = vunpack.c.0.s8 %v724
        %v726 = vlaneseq
        %v727 = vshrl.u32 %v726, 7
        %v728 = vsub.s32 %v725, %v727
        %v729 = vrot.slane %v715, %v728
        %v730 = vcombine.high %v722, 0
        %v731 = vcombine.high %v729, 0
        %v734 = vunpack.c.l.s4 1983009808
        %v735 = vunpack.c.0.s8 %v734
        %v736 = vlaneseq
        %v737 = vshrl.u32 %v736, 7
        %v738 = vsub.s32 %v735, %v737
        %v739 = vrot.slane %v693, %v738
        %v742 = vunpack.c.l.s4 1983009808
        %v743 = vunpack.c.0.s8 %v742
        %v744 = vlaneseq
        %v745 = vshrl.u32 %v744, 7
        %v746 = vsub.s32 %v743, %v745
        %v747 = vrot.slane %v697, %v746
        %v748 = vcombine.low %v739, %v747
        %v749 = vcombine.high %v739, %v747
        %v751 = vunpack.c.l.s4 1934713408
        %v752 = vunpack.c.0.s8 %v751
        %v753 = vlaneseq
        %v754 = vshrl.u32 %v753, 7
        %v755 = vsub.s32 %v752, %v754
        %v756 = vrot.slane %v748, %v755
        %v758 = vunpack.c.l.s4 1934713408
        %v759 = vunpack.c.0.s8 %v758
        %v760 = vlaneseq
        %v761 = vshrl.u32 %v760, 7
        %v762 = vsub.s32 %v759, %v761
        %v763 = vrot.slane %v749, %v762
        %v764 = vcombine.high %v756, 0
        %v765 = vcombine.high %v763, 0
        %v768 = vpack.i.b16 %v756, %v722
        %v770 = vshrl.u32 %v722, 16
        %v771 = vshrl.u32 %v756, 16
        %v772 = vpack.i.b16 %v771, %v770
        %v776 = vpack.i.b16 %v764, %v730
        %v778 = vshrl.u32 %v730, 16
        %v779 = vshrl.u32 %v764, 16
        %v780 = vpack.i.b16 %v779, %v778
        %v784 = vpack.i.b16 %v763, %v729
        %v786 = vshrl.u32 %v729, 16
        %v787 = vshrl.u32 %v763, 16
        %v788 = vpack.i.b16 %v787, %v786
        %v792 = vpack.i.b16 %v765, %v731
        %v794 = vshrl.u32 %v731, 16
        %v795 = vshrl.u32 %v765, 16
        %v796 = vpack.i.b16 %v795, %v794
        %v798 = vcombine.low %v768, %v784
        %v800 = vunpack.c.l.s4 1983009808
        %v801 = vunpack.c.0.s8 %v800
        %v802 = vlaneseq
        %v803 = vshrl.u32 %v802, 7
        %v804 = vsub.s32 %v801, %v803
        %v805 = vrot.slane %v798, %v804
        %v806 = vcombine.low %v776, %v792
        %v808 = vunpack.c.l.s4 1983009808
        %v809 = vunpack.c.0.s8 %v808
        %v810 = vlaneseq
        %v811 = vshrl.u32 %v810, 7
        %v812 = vsub.s32 %v809, %v811
        %v813 = vrot.slane %v806, %v812
        %v814 = vcombine.low %v805, %v813
        %v816 = vunpack.c.l.s4 1934713408
        %v817 = vunpack.c.0.s8 %v816
        %v818 = vlaneseq
        %v819 = vshrl.u32 %v818, 7
        %v820 = vsub.s32 %v817, %v819
        %v821 = vrot.slane %v814, %v820
        %v822 = vcombine.high %v821, 0
        %v823 = vcombine.low %v772, %v788
        %v825 = vunpack.c.l.s4 1983009808
        %v826 = vunpack.c.0.s8 %v825
        %v827 = vlaneseq
        %v828 = vshrl.u32 %v827, 7
        %v829 = vsub.s32 %v826, %v828
        %v830 = vrot.slane %v823, %v829
        %v831 = vcombine.low %v780, %v796
        %v833 = vunpack.c.l.s4 1983009808
        %v834 = vunpack.c.0.s8 %v833
        %v835 = vlaneseq
        %v836 = vshrl.u32 %v835, 7
        %v837 = vsub.s32 %v834, %v836
        %v838 = vrot.slane %v831, %v837
        %v839 = vcombine.low %v830, %v838
        %v841 = vunpack.c.l.s4 1934713408
        %v842 = vunpack.c.0.s8 %v841
        %v843 = vlaneseq
        %v844 = vshrl.u32 %v843, 7
        %v845 = vsub.s32 %v842, %v844
        %v846 = vrot.slane %v839, %v845
        %v847 = vcombine.high %v846, 0
        %v850 = vpack.i.b16 %v846, %v821
        %v851 = vshrl.u32 %v821, 16
        %v852 = vshrl.u32 %v846, 16
        %v853 = vpack.i.b16 %v852, %v851
        %v856 = vpack.i.b16 %v847, %v822
        %v857 = vshrl.u32 %v822, 16
        %v858 = vshrl.u32 %v847, 16
        %v859 = vpack.i.b16 %v858, %v857
        %860 = vrot.lane.b32.xlu0 %v521, 64
        %v861 = vpop.permute.xlu0 %860
        %862 = vrot.lane.b32.xlu0 %v524, 64
        %v863 = vpop.permute.xlu0 %862
        %864 = vrot.lane.b32.xlu0 %v526, 64
        %v865 = vpop.permute.xlu0 %864
        %866 = vrot.lane.b32.xlu0 %v528, 64
        %v867 = vpop.permute.xlu0 %866
        %v870 = vunpack.c.l.s4 1983009808
        %v871 = vunpack.c.0.s8 %v870
        %v872 = vlaneseq
        %v873 = vshrl.u32 %v872, 7
        %v874 = vsub.s32 %v871, %v873
        %v875 = vrot.slane %v861, %v874
        %v878 = vunpack.c.l.s4 1983009808
        %v879 = vunpack.c.0.s8 %v878
        %v880 = vlaneseq
        %v881 = vshrl.u32 %v880, 7
        %v882 = vsub.s32 %v879, %v881
        %v883 = vrot.slane %v865, %v882
        %v884 = vcombine.low %v875, %v883
        %v885 = vcombine.high %v875, %v883
        %v887 = vunpack.c.l.s4 1934713408
        %v888 = vunpack.c.0.s8 %v887
        %v889 = vlaneseq
        %v890 = vshrl.u32 %v889, 7
        %v891 = vsub.s32 %v888, %v890
        %v892 = vrot.slane %v884, %v891
        %v894 = vunpack.c.l.s4 1934713408
        %v895 = vunpack.c.0.s8 %v894
        %v896 = vlaneseq
        %v897 = vshrl.u32 %v896, 7
        %v898 = vsub.s32 %v895, %v897
        %v899 = vrot.slane %v885, %v898
        %v900 = vcombine.high %v892, 0
        %v901 = vcombine.high %v899, 0
        %v904 = vunpack.c.l.s4 1983009808
        %v905 = vunpack.c.0.s8 %v904
        %v906 = vlaneseq
        %v907 = vshrl.u32 %v906, 7
        %v908 = vsub.s32 %v905, %v907
        %v909 = vrot.slane %v863, %v908
        %v912 = vunpack.c.l.s4 1983009808
        %v913 = vunpack.c.0.s8 %v912
        %v914 = vlaneseq
        %v915 = vshrl.u32 %v914, 7
        %v916 = vsub.s32 %v913, %v915
        %v917 = vrot.slane %v867, %v916
        %v918 = vcombine.low %v909, %v917
        %v919 = vcombine.high %v909, %v917
        %v921 = vunpack.c.l.s4 1934713408
        %v922 = vunpack.c.0.s8 %v921
        %v923 = vlaneseq
        %v924 = vshrl.u32 %v923, 7
        %v925 = vsub.s32 %v922, %v924
        %v926 = vrot.slane %v918, %v925
        %v928 = vunpack.c.l.s4 1934713408
        %v929 = vunpack.c.0.s8 %v928
        %v930 = vlaneseq
        %v931 = vshrl.u32 %v930, 7
        %v932 = vsub.s32 %v929, %v931
        %v933 = vrot.slane %v919, %v932
        %v934 = vcombine.high %v926, 0
        %v935 = vcombine.high %v933, 0
        %v938 = vpack.i.b16 %v926, %v892
        %v940 = vshrl.u32 %v892, 16
        %v941 = vshrl.u32 %v926, 16
        %v942 = vpack.i.b16 %v941, %v940
        %v946 = vpack.i.b16 %v934, %v900
        %v948 = vshrl.u32 %v900, 16
        %v949 = vshrl.u32 %v934, 16
        %v950 = vpack.i.b16 %v949, %v948
        %v954 = vpack.i.b16 %v933, %v899
        %v956 = vshrl.u32 %v899, 16
        %v957 = vshrl.u32 %v933, 16
        %v958 = vpack.i.b16 %v957, %v956
        %v962 = vpack.i.b16 %v935, %v901
        %v964 = vshrl.u32 %v901, 16
        %v965 = vshrl.u32 %v935, 16
        %v966 = vpack.i.b16 %v965, %v964
        %v968 = vcombine.low %v938, %v954
        %v970 = vunpack.c.l.s4 1983009808
        %v971 = vunpack.c.0.s8 %v970
        %v972 = vlaneseq
        %v973 = vshrl.u32 %v972, 7
        %v974 = vsub.s32 %v971, %v973
        %v975 = vrot.slane %v968, %v974
        %v976 = vcombine.low %v946, %v962
        %v978 = vunpack.c.l.s4 1983009808
        %v979 = vunpack.c.0.s8 %v978
        %v980 = vlaneseq
        %v981 = vshrl.u32 %v980, 7
        %v982 = vsub.s32 %v979, %v981
        %v983 = vrot.slane %v976, %v982
        %v984 = vcombine.low %v975, %v983
        %v986 = vunpack.c.l.s4 1934713408
        %v987 = vunpack.c.0.s8 %v986
        %v988 = vlaneseq
        %v989 = vshrl.u32 %v988, 7
        %v990 = vsub.s32 %v987, %v989
        %v991 = vrot.slane %v984, %v990
        %v992 = vcombine.high %v991, 0
        %v993 = vcombine.low %v942, %v958
        %v995 = vunpack.c.l.s4 1983009808
        %v996 = vunpack.c.0.s8 %v995
        %v997 = vlaneseq
        %v998 = vshrl.u32 %v997, 7
        %v999 = vsub.s32 %v996, %v998
        %v1000 = vrot.slane %v993, %v999
        %v1001 = vcombine.low %v950, %v966
        %v1003 = vunpack.c.l.s4 1983009808
        %v1004 = vunpack.c.0.s8 %v1003
        %v1005 = vlaneseq
        %v1006 = vshrl.u32 %v1005, 7
        %v1007 = vsub.s32 %v1004, %v1006
        %v1008 = vrot.slane %v1001, %v1007
        %v1009 = vcombine.low %v1000, %v1008
        %v1011 = vunpack.c.l.s4 1934713408
        %v1012 = vunpack.c.0.s8 %v1011
        %v1013 = vlaneseq
        %v1014 = vshrl.u32 %v1013, 7
        %v1015 = vsub.s32 %v1012, %v1014
        %v1016 = vrot.slane %v1009, %v1015
        %v1017 = vcombine.high %v1016, 0
        %v1020 = vpack.i.b16 %v1016, %v991
        %v1021 = vshrl.u32 %v991, 16
        %v1022 = vshrl.u32 %v1016, 16
        %v1023 = vpack.i.b16 %v1022, %v1021
        %v1026 = vpack.i.b16 %v1017, %v992
        %v1027 = vshrl.u32 %v992, 16
        %v1028 = vshrl.u32 %v1017, 16
        %v1029 = vpack.i.b16 %v1028, %v1027
        %vm1030 = vcmask 64512
        %v1032 = vsel %vm1030, %v680, 0
        %v1035 = vsel %vm1030, %v850, 0
        %1037 = vmatprep.subr.bf16.mxu0 0
        %1038 = vmatpush1.bf16.xpose.msra.mxu0 %v1035
        %1039 = vmatprep.subr.bf16.mxu0 0
        %1040 = vmatpush1.bf16.xpose.msra.mxu0 0
        %1041 = vmatprep.subr.bf16.mxu0 0
        %1042 = vmatpush1.bf16.xpose.msra.mxu0 0
        %1043 = vmatprep.subr.bf16.mxu0 0
        %1044 = vmatpush1.bf16.xpose.msra.mxu0 0
        %1045 = vmatprep.subr.bf16.mxu0 0
        %1046 = vmatpush1.bf16.xpose.msra.mxu0 0
        %1047 = vmatprep.subr.bf16.mxu0 0
        %1048 = vmatpush1.bf16.xpose.msra.mxu0 0
        %1049 = vmatprep.subr.bf16.mxu0 0
        %1050 = vmatpush1.bf16.xpose.msra.mxu0 0
        %1051 = vmatprep.subr.bf16.mxu0 0
        %1052 = vmatpush1.bf16.xpose.msra.mxu0 0
        %1053 = vmatprep.subr.bf16.mxu0 0
        %1054 = vmatpush1.bf16.xpose.msra.mxu0 0
        %1055 = vmatprep.subr.bf16.mxu0 0
        %1056 = vmatpush1.bf16.xpose.msra.mxu0 0
        %1057 = vmatprep.subr.bf16.mxu0 0
        %1058 = vmatpush1.bf16.xpose.msra.mxu0 0
        %1059 = vmatprep.subr.bf16.mxu0 0
        %1060 = vmatpush1.bf16.xpose.msra.mxu0 0
        %1061 = vmatprep.subr.bf16.mxu0 0
        %1062 = vmatpush1.bf16.xpose.msra.mxu0 0
        %1063 = vmatprep.subr.bf16.mxu0 0
        %1064 = vmatpush1.bf16.xpose.msra.mxu0 0
        %1065 = vmatprep.subr.bf16.mxu0 0
        %1066 = vmatpush1.bf16.xpose.msra.mxu0 0
        %1067 = vmatprep.subr.bf16.mxu0 0
        %1068 = vmatpush1.bf16.xpose.msra.mxu0 0
        %1069 = vmatprep.mubr.bf16.mxu0 0
        %1070 = vmatmul.mubr.bf16.gmra.mrb[0].mxu0 %v1032
        %v1071 = vpop.f32.mrb[0].mxu0
        %v1072 = vadd.f32 0.0, %v1071
        %v1073 = vpop.f32.mrb[0].mxu0
        %v1074 = vpop.f32.mrb[0].mxu0
        %v1075 = vpop.f32.mrb[0].mxu0
        %1076 = vdwg.mxu0
        %v1078 = vsel %vm1030, %v683, 0
        %v1081 = vsel %vm1030, %v853, 0
        %1083 = vmatprep.subr.bf16.mxu0 0
        %1084 = vmatpush1.bf16.xpose.msra.mxu0 %v1081
        %1085 = vmatprep.subr.bf16.mxu0 0
        %1086 = vmatpush1.bf16.xpose.msra.mxu0 0
        %1087 = vmatprep.subr.bf16.mxu0 0
        %1088 = vmatpush1.bf16.xpose.msra.mxu0 0
        %1089 = vmatprep.subr.bf16.mxu0 0
        %1090 = vmatpush1.bf16.xpose.msra.mxu0 0
        %1091 = vmatprep.subr.bf16.mxu0 0
        %1092 = vmatpush1.bf16.xpose.msra.mxu0 0
        %1093 = vmatprep.subr.bf16.mxu0 0
        %1094 = vmatpush1.bf16.xpose.msra.mxu0 0
        %1095 = vmatprep.subr.bf16.mxu0 0
        %1096 = vmatpush1.bf16.xpose.msra.mxu0 0
        %1097 = vmatprep.subr.bf16.mxu0 0
        %1098 = vmatpush1.bf16.xpose.msra.mxu0 0
        %1099 = vmatprep.subr.bf16.mxu0 0
        %1100 = vmatpush1.bf16.xpose.msra.mxu0 0
        %1101 = vmatprep.subr.bf16.mxu0 0
        %1102 = vmatpush1.bf16.xpose.msra.mxu0 0
        %1103 = vmatprep.subr.bf16.mxu0 0
        %1104 = vmatpush1.bf16.xpose.msra.mxu0 0
        %1105 = vmatprep.subr.bf16.mxu0 0
        %1106 = vmatpush1.bf16.xpose.msra.mxu0 0
        %1107 = vmatprep.subr.bf16.mxu0 0
        %1108 = vmatpush1.bf16.xpose.msra.mxu0 0
        %1109 = vmatprep.subr.bf16.mxu0 0
        %1110 = vmatpush1.bf16.xpose.msra.mxu0 0
        %1111 = vmatprep.subr.bf16.mxu0 0
        %1112 = vmatpush1.bf16.xpose.msra.mxu0 0
        %1113 = vmatprep.subr.bf16.mxu0 0
        %1114 = vmatpush1.bf16.xpose.msra.mxu0 0
        %1115 = vmatprep.mubr.bf16.mxu0 0
        %1116 = vmatmul.mubr.bf16.gmra.mrb[0].mxu0 %v1078
        %v1117 = vpop.f32.mrb[0].mxu0
        %v1118 = vadd.f32 0.0, %v1117
        %v1119 = vpop.f32.mrb[0].mxu0
        %v1120 = vpop.f32.mrb[0].mxu0
        %v1121 = vpop.f32.mrb[0].mxu0
        %1122 = vdwg.mxu0
        %v1124 = vsel %vm1030, %v686, 0
        %v1127 = vsel %vm1030, %v856, 0
        %1129 = vmatprep.subr.bf16.mxu0 0
        %1130 = vmatpush1.bf16.xpose.msra.mxu0 %v1127
        %1131 = vmatprep.subr.bf16.mxu0 0
        %1132 = vmatpush1.bf16.xpose.msra.mxu0 0
        %1133 = vmatprep.subr.bf16.mxu0 0
        %1134 = vmatpush1.bf16.xpose.msra.mxu0 0
        %1135 = vmatprep.subr.bf16.mxu0 0
        %1136 = vmatpush1.bf16.xpose.msra.mxu0 0
        %1137 = vmatprep.subr.bf16.mxu0 0
        %1138 = vmatpush1.bf16.xpose.msra.mxu0 0
        %1139 = vmatprep.subr.bf16.mxu0 0
        %1140 = vmatpush1.bf16.xpose.msra.mxu0 0
        %1141 = vmatprep.subr.bf16.mxu0 0
        %1142 = vmatpush1.bf16.xpose.msra.mxu0 0
        %1143 = vmatprep.subr.bf16.mxu0 0
        %1144 = vmatpush1.bf16.xpose.msra.mxu0 0
        %1145 = vmatprep.subr.bf16.mxu0 0
        %1146 = vmatpush1.bf16.xpose.msra.mxu0 0
        %1147 = vmatprep.subr.bf16.mxu0 0
        %1148 = vmatpush1.bf16.xpose.msra.mxu0 0
        %1149 = vmatprep.subr.bf16.mxu0 0
        %1150 = vmatpush1.bf16.xpose.msra.mxu0 0
        %1151 = vmatprep.subr.bf16.mxu0 0
        %1152 = vmatpush1.bf16.xpose.msra.mxu0 0
        %1153 = vmatprep.subr.bf16.mxu0 0
        %1154 = vmatpush1.bf16.xpose.msra.mxu0 0
        %1155 = vmatprep.subr.bf16.mxu0 0
        %1156 = vmatpush1.bf16.xpose.msra.mxu0 0
        %1157 = vmatprep.subr.bf16.mxu0 0
        %1158 = vmatpush1.bf16.xpose.msra.mxu0 0
        %1159 = vmatprep.subr.bf16.mxu0 0
        %1160 = vmatpush1.bf16.xpose.msra.mxu0 0
        %1161 = vmatprep.mubr.bf16.mxu0 0
        %1162 = vmatmul.mubr.bf16.gmra.mrb[0].mxu0 %v1124
        %v1163 = vpop.f32.mrb[0].mxu0
        %v1164 = vadd.f32 0.0, %v1163
        %v1165 = vpop.f32.mrb[0].mxu0
        %v1166 = vpop.f32.mrb[0].mxu0
        %v1167 = vpop.f32.mrb[0].mxu0
        %1168 = vdwg.mxu0
        %v1170 = vsel %vm1030, %v689, 0
        %v1173 = vsel %vm1030, %v859, 0
        %1175 = vmatprep.subr.bf16.mxu0 0
        %1176 = vmatpush1.bf16.xpose.msra.mxu0 %v1173
        %1177 = vmatprep.subr.bf16.mxu0 0
        %1178 = vmatpush1.bf16.xpose.msra.mxu0 0
        %1179 = vmatprep.subr.bf16.mxu0 0
        %1180 = vmatpush1.bf16.xpose.msra.mxu0 0
        %1181 = vmatprep.subr.bf16.mxu0 0
        %1182 = vmatpush1.bf16.xpose.msra.mxu0 0
        %1183 = vmatprep.subr.bf16.mxu0 0
        %1184 = vmatpush1.bf16.xpose.msra.mxu0 0
        %1185 = vmatprep.subr.bf16.mxu0 0
        %1186 = vmatpush1.bf16.xpose.msra.mxu0 0
        %1187 = vmatprep.subr.bf16.mxu0 0
        %1188 = vmatpush1.bf16.xpose.msra.mxu0 0
        %1189 = vmatprep.subr.bf16.mxu0 0
        %1190 = vmatpush1.bf16.xpose.msra.mxu0 0
        %1191 = vmatprep.subr.bf16.mxu0 0
        %1192 = vmatpush1.bf16.xpose.msra.mxu0 0
        %1193 = vmatprep.subr.bf16.mxu0 0
        %1194 = vmatpush1.bf16.xpose.msra.mxu0 0
        %1195 = vmatprep.subr.bf16.mxu0 0
        %1196 = vmatpush1.bf16.xpose.msra.mxu0 0
        %1197 = vmatprep.subr.bf16.mxu0 0
        %1198 = vmatpush1.bf16.xpose.msra.mxu0 0
        %1199 = vmatprep.subr.bf16.mxu0 0
        %1200 = vmatpush1.bf16.xpose.msra.mxu0 0
        %1201 = vmatprep.subr.bf16.mxu0 0
        %1202 = vmatpush1.bf16.xpose.msra.mxu0 0
        %1203 = vmatprep.subr.bf16.mxu0 0
        %1204 = vmatpush1.bf16.xpose.msra.mxu0 0
        %1205 = vmatprep.subr.bf16.mxu0 0
        %1206 = vmatpush1.bf16.xpose.msra.mxu0 0
        %1207 = vmatprep.mubr.bf16.mxu0 0
        %1208 = vmatmul.mubr.bf16.gmra.mrb[0].mxu0 %v1170
        %v1209 = vpop.f32.mrb[0].mxu0
        %v1210 = vadd.f32 0.0, %v1209
        %v1211 = vpop.f32.mrb[0].mxu0
        %v1212 = vpop.f32.mrb[0].mxu0
        %v1213 = vpop.f32.mrb[0].mxu0
        %1214 = vdwg.mxu0
        %v1215 = vsel %vm1030, %v1072, -inf
        %1216 = vmax.xlane.f32.xlu0 %v1215
        %v1217 = vpop.xlane.xlu0 %1216
        %v1218 = vsel %vm1030, %v1118, -inf
        %1219 = vmax.xlane.f32.xlu0 %v1218
        %v1220 = vpop.xlane.xlu0 %1219
        %v1221 = vsel %vm1030, %v1164, -inf
        %1222 = vmax.xlane.f32.xlu0 %v1221
        %v1223 = vpop.xlane.xlu0 %1222
        %v1224 = vsel %vm1030, %v1210, -inf
        %1225 = vmax.xlane.f32.xlu0 %v1224
        %v1226 = vpop.xlane.xlu0 %1225
        %v1227 = vsub.f32 %v1072, %v1217
        %v1228 = vsub.f32 %v1118, %v1220
        %v1229 = vsub.f32 %v1164, %v1223
        %v1230 = vsub.f32 %v1210, %v1226
        %v1231 = vmul.f32 %v1227, 1.442695
        %v1232 = vpow.pop %v1231
        %v1233 = vmul.f32 %v1228, 1.442695
        %v1234 = vpow.pop %v1233
        %v1235 = vmul.f32 %v1229, 1.442695
        %v1236 = vpow.pop %v1235
        %v1237 = vmul.f32 %v1230, 1.442695
        %v1238 = vpow.pop %v1237
        %v1239 = vsel %vm1030, %v1232, 0.0
        %1240 = vadd.xlane.f32.xlu0 %v1239
        %v1241 = vpop.xlane.xlu0 %1240
        %v1242 = vsel %vm1030, %v1234, 0.0
        %1243 = vadd.xlane.f32.xlu0 %v1242
        %v1244 = vpop.xlane.xlu0 %1243
        %v1245 = vsel %vm1030, %v1236, 0.0
        %1246 = vadd.xlane.f32.xlu0 %v1245
        %v1247 = vpop.xlane.xlu0 %1246
        %v1248 = vsel %vm1030, %v1238, 0.0
        %1249 = vadd.xlane.f32.xlu0 %v1248
        %v1250 = vpop.xlane.xlu0 %1249
        %v1251 = vrcp.pop %v1241
        %v1252 = vrcp.pop %v1244
        %v1253 = vrcp.pop %v1247
        %v1254 = vrcp.pop %v1250
        %v1255 = vmul.f32 %v1232, %v1251
        %v1256 = vmul.f32 %v1234, %v1252
        %v1257 = vmul.f32 %v1236, %v1253
        %v1258 = vmul.f32 %v1238, %v1254
        %v1259 = vpack.c.bf16 %v1255, %v1255
        %v1260 = vpack.c.bf16 %v1256, %v1256
        %v1261 = vpack.c.bf16 %v1257, %v1257
        %v1262 = vpack.c.bf16 %v1258, %v1258
        %v1264 = vsel %vm1030, %v1259, 0
        %vm1266 = vcmask 1043456
        %v1268 = vsel %vm1266, %v1020, 0
        %1270 = vmatprep.subr.bf16.mxu0 0
        %1271 = vmatpush1.bf16.msra.mxu0 %v1268
        %1272 = vmatprep.subr.bf16.mxu0 0
        %1273 = vmatpush1.bf16.msra.mxu0 0
        %1274 = vmatprep.subr.bf16.mxu0 0
        %1275 = vmatpush1.bf16.msra.mxu0 0
        %1276 = vmatprep.subr.bf16.mxu0 0
        %1277 = vmatpush1.bf16.msra.mxu0 0
        %1278 = vmatprep.subr.bf16.mxu0 0
        %1279 = vmatpush1.bf16.msra.mxu0 0
        %1280 = vmatprep.subr.bf16.mxu0 0
        %1281 = vmatpush1.bf16.msra.mxu0 0
        %1282 = vmatprep.subr.bf16.mxu0 0
        %1283 = vmatpush1.bf16.msra.mxu0 0
        %1284 = vmatprep.subr.bf16.mxu0 0
        %1285 = vmatpush1.bf16.msra.mxu0 0
        %1286 = vmatprep.subr.bf16.mxu0 0
        %1287 = vmatpush1.bf16.msra.mxu0 0
        %1288 = vmatprep.subr.bf16.mxu0 0
        %1289 = vmatpush1.bf16.msra.mxu0 0
        %1290 = vmatprep.subr.bf16.mxu0 0
        %1291 = vmatpush1.bf16.msra.mxu0 0
        %1292 = vmatprep.subr.bf16.mxu0 0
        %1293 = vmatpush1.bf16.msra.mxu0 0
        %1294 = vmatprep.subr.bf16.mxu0 0
        %1295 = vmatpush1.bf16.msra.mxu0 0
        %1296 = vmatprep.subr.bf16.mxu0 0
        %1297 = vmatpush1.bf16.msra.mxu0 0
        %1298 = vmatprep.subr.bf16.mxu0 0
        %1299 = vmatpush1.bf16.msra.mxu0 0
        %1300 = vmatprep.subr.bf16.mxu0 0
        %1301 = vmatpush1.bf16.msra.mxu0 0
        %1302 = vmatprep.mubr.bf16.mxu0 0
        %1303 = vmatmul.mubr.bf16.gmra.mrb[0].mxu0 %v1264
        %v1304 = vpop.f32.mrb[0].mxu0
        %v1305 = vadd.f32 0.0, %v1304
        %v1306 = vpop.f32.mrb[0].mxu0
        %v1307 = vpop.f32.mrb[0].mxu0
        %v1308 = vpop.f32.mrb[0].mxu0
        %1309 = vdwg.mxu0
        %v1311 = vsel %vm1030, %v1260, 0
        %v1314 = vsel %vm1266, %v1023, 0
        %1316 = vmatprep.subr.bf16.mxu0 0
        %1317 = vmatpush1.bf16.msra.mxu0 %v1314
        %1318 = vmatprep.subr.bf16.mxu0 0
        %1319 = vmatpush1.bf16.msra.mxu0 0
        %1320 = vmatprep.subr.bf16.mxu0 0
        %1321 = vmatpush1.bf16.msra.mxu0 0
        %1322 = vmatprep.subr.bf16.mxu0 0
        %1323 = vmatpush1.bf16.msra.mxu0 0
        %1324 = vmatprep.subr.bf16.mxu0 0
        %1325 = vmatpush1.bf16.msra.mxu0 0
        %1326 = vmatprep.subr.bf16.mxu0 0
        %1327 = vmatpush1.bf16.msra.mxu0 0
        %1328 = vmatprep.subr.bf16.mxu0 0
        %1329 = vmatpush1.bf16.msra.mxu0 0
        %1330 = vmatprep.subr.bf16.mxu0 0
        %1331 = vmatpush1.bf16.msra.mxu0 0
        %1332 = vmatprep.subr.bf16.mxu0 0
        %1333 = vmatpush1.bf16.msra.mxu0 0
        %1334 = vmatprep.subr.bf16.mxu0 0
        %1335 = vmatpush1.bf16.msra.mxu0 0
        %1336 = vmatprep.subr.bf16.mxu0 0
        %1337 = vmatpush1.bf16.msra.mxu0 0
        %1338 = vmatprep.subr.bf16.mxu0 0
        %1339 = vmatpush1.bf16.msra.mxu0 0
        %1340 = vmatprep.subr.bf16.mxu0 0
        %1341 = vmatpush1.bf16.msra.mxu0 0
        %1342 = vmatprep.subr.bf16.mxu0 0
        %1343 = vmatpush1.bf16.msra.mxu0 0
        %1344 = vmatprep.subr.bf16.mxu0 0
        %1345 = vmatpush1.bf16.msra.mxu0 0
        %1346 = vmatprep.subr.bf16.mxu0 0
        %1347 = vmatpush1.bf16.msra.mxu0 0
        %1348 = vmatprep.mubr.bf16.mxu0 0
        %1349 = vmatmul.mubr.bf16.gmra.mrb[0].mxu0 %v1311
        %v1350 = vpop.f32.mrb[0].mxu0
        %v1351 = vadd.f32 0.0, %v1350
        %v1352 = vpop.f32.mrb[0].mxu0
        %v1353 = vpop.f32.mrb[0].mxu0
        %v1354 = vpop.f32.mrb[0].mxu0
        %1355 = vdwg.mxu0
        %v1357 = vsel %vm1030, %v1261, 0
        %v1360 = vsel %vm1266, %v1026, 0
        %1362 = vmatprep.subr.bf16.mxu0 0
        %1363 = vmatpush1.bf16.msra.mxu0 %v1360
        %1364 = vmatprep.subr.bf16.mxu0 0
        %1365 = vmatpush1.bf16.msra.mxu0 0
        %1366 = vmatprep.subr.bf16.mxu0 0
        %1367 = vmatpush1.bf16.msra.mxu0 0
        %1368 = vmatprep.subr.bf16.mxu0 0
        %1369 = vmatpush1.bf16.msra.mxu0 0
        %1370 = vmatprep.subr.bf16.mxu0 0
        %1371 = vmatpush1.bf16.msra.mxu0 0
        %1372 = vmatprep.subr.bf16.mxu0 0
        %1373 = vmatpush1.bf16.msra.mxu0 0
        %1374 = vmatprep.subr.bf16.mxu0 0
        %1375 = vmatpush1.bf16.msra.mxu0 0
        %1376 = vmatprep.subr.bf16.mxu0 0
        %1377 = vmatpush1.bf16.msra.mxu0 0
        %1378 = vmatprep.subr.bf16.mxu0 0
        %1379 = vmatpush1.bf16.msra.mxu0 0
        %1380 = vmatprep.subr.bf16.mxu0 0
        %1381 = vmatpush1.bf16.msra.mxu0 0
        %1382 = vmatprep.subr.bf16.mxu0 0
        %1383 = vmatpush1.bf16.msra.mxu0 0
        %1384 = vmatprep.subr.bf16.mxu0 0
        %1385 = vmatpush1.bf16.msra.mxu0 0
        %1386 = vmatprep.subr.bf16.mxu0 0
        %1387 = vmatpush1.bf16.msra.mxu0 0
        %1388 = vmatprep.subr.bf16.mxu0 0
        %1389 = vmatpush1.bf16.msra.mxu0 0
        %1390 = vmatprep.subr.bf16.mxu0 0
        %1391 = vmatpush1.bf16.msra.mxu0 0
        %1392 = vmatprep.subr.bf16.mxu0 0
        %1393 = vmatpush1.bf16.msra.mxu0 0
        %1394 = vmatprep.mubr.bf16.mxu0 0
        %1395 = vmatmul.mubr.bf16.gmra.mrb[0].mxu0 %v1357
        %v1396 = vpop.f32.mrb[0].mxu0
        %v1397 = vadd.f32 0.0, %v1396
        %v1398 = vpop.f32.mrb[0].mxu0
        %v1399 = vpop.f32.mrb[0].mxu0
        %v1400 = vpop.f32.mrb[0].mxu0
        %1401 = vdwg.mxu0
        %v1403 = vsel %vm1030, %v1262, 0
        %v1406 = vsel %vm1266, %v1029, 0
        %1408 = vmatprep.subr.bf16.mxu0 0
        %1409 = vmatpush1.bf16.msra.mxu0 %v1406
        %1410 = vmatprep.subr.bf16.mxu0 0
        %1411 = vmatpush1.bf16.msra.mxu0 0
        %1412 = vmatprep.subr.bf16.mxu0 0
        %1413 = vmatpush1.bf16.msra.mxu0 0
        %1414 = vmatprep.subr.bf16.mxu0 0
        %1415 = vmatpush1.bf16.msra.mxu0 0
        %1416 = vmatprep.subr.bf16.mxu0 0
        %1417 = vmatpush1.bf16.msra.mxu0 0
        %1418 = vmatprep.subr.bf16.mxu0 0
        %1419 = vmatpush1.bf16.msra.mxu0 0
        %1420 = vmatprep.subr.bf16.mxu0 0
        %1421 = vmatpush1.bf16.msra.mxu0 0
        %1422 = vmatprep.subr.bf16.mxu0 0
        %1423 = vmatpush1.bf16.msra.mxu0 0
        %1424 = vmatprep.subr.bf16.mxu0 0
        %1425 = vmatpush1.bf16.msra.mxu0 0
        %1426 = vmatprep.subr.bf16.mxu0 0
        %1427 = vmatpush1.bf16.msra.mxu0 0
        %1428 = vmatprep.subr.bf16.mxu0 0
        %1429 = vmatpush1.bf16.msra.mxu0 0
        %1430 = vmatprep.subr.bf16.mxu0 0
        %1431 = vmatpush1.bf16.msra.mxu0 0
        %1432 = vmatprep.subr.bf16.mxu0 0
        %1433 = vmatpush1.bf16.msra.mxu0 0
        %1434 = vmatprep.subr.bf16.mxu0 0
        %1435 = vmatpush1.bf16.msra.mxu0 0
        %1436 = vmatprep.subr.bf16.mxu0 0
        %1437 = vmatpush1.bf16.msra.mxu0 0
        %1438 = vmatprep.subr.bf16.mxu0 0
        %1439 = vmatpush1.bf16.msra.mxu0 0
        %1440 = vmatprep.mubr.bf16.mxu0 0
        %1441 = vmatmul.mubr.bf16.gmra.mrb[0].mxu0 %v1403
        %v1442 = vpop.f32.mrb[0].mxu0
        %v1443 = vadd.f32 0.0, %v1442
        %v1444 = vpop.f32.mrb[0].mxu0
        %v1445 = vpop.f32.mrb[0].mxu0
        %v1446 = vpop.f32.mrb[0].mxu0
        %1447 = vdwg.mxu0
        %v1448 = vpack.c.bf16 %v1305, %v1305
        %v1450 = vunpack.c.l.s4 1983009808
        %v1451 = vunpack.c.0.s8 %v1450
        %v1452 = vlaneseq
        %v1453 = vshrl.u32 %v1452, 7
        %v1454 = vsub.s32 %v1451, %v1453
        %v1455 = vrot.slane %v1448, %v1454
        %v1456 = vpack.c.bf16 %v1397, %v1397
        %v1458 = vunpack.c.l.s4 1983009808
        %v1459 = vunpack.c.0.s8 %v1458
        %v1460 = vlaneseq
        %v1461 = vshrl.u32 %v1460, 7
        %v1462 = vsub.s32 %v1459, %v1461
        %v1463 = vrot.slane %v1456, %v1462
        %v1464 = vcombine.low %v1455, %v1463
        %v1465 = vcombine.high %v1455, %v1463
        %v1467 = vunpack.c.l.s4 1934713408
        %v1468 = vunpack.c.0.s8 %v1467
        %v1469 = vlaneseq
        %v1470 = vshrl.u32 %v1469, 7
        %v1471 = vsub.s32 %v1468, %v1470
        %v1472 = vrot.slane %v1464, %v1471
        %v1474 = vunpack.c.l.s4 1934713408
        %v1475 = vunpack.c.0.s8 %v1474
        %v1476 = vlaneseq
        %v1477 = vshrl.u32 %v1476, 7
        %v1478 = vsub.s32 %v1475, %v1477
        %v1479 = vrot.slane %v1465, %v1478
        %v1480 = vcombine.high %v1472, 0
        %v1481 = vcombine.high %v1479, 0
        %v1482 = vpack.c.bf16 %v1351, %v1351
        %v1484 = vunpack.c.l.s4 1983009808
        %v1485 = vunpack.c.0.s8 %v1484
        %v1486 = vlaneseq
        %v1487 = vshrl.u32 %v1486, 7
        %v1488 = vsub.s32 %v1485, %v1487
        %v1489 = vrot.slane %v1482, %v1488
        %v1490 = vpack.c.bf16 %v1443, %v1443
        %v1492 = vunpack.c.l.s4 1983009808
        %v1493 = vunpack.c.0.s8 %v1492
        %v1494 = vlaneseq
        %v1495 = vshrl.u32 %v1494, 7
        %v1496 = vsub.s32 %v1493, %v1495
        %v1497 = vrot.slane %v1490, %v1496
        %v1498 = vcombine.low %v1489, %v1497
        %v1499 = vcombine.high %v1489, %v1497
        %v1501 = vunpack.c.l.s4 1934713408
        %v1502 = vunpack.c.0.s8 %v1501
        %v1503 = vlaneseq
        %v1504 = vshrl.u32 %v1503, 7
        %v1505 = vsub.s32 %v1502, %v1504
        %v1506 = vrot.slane %v1498, %v1505
        %v1508 = vunpack.c.l.s4 1934713408
        %v1509 = vunpack.c.0.s8 %v1508
        %v1510 = vlaneseq
        %v1511 = vshrl.u32 %v1510, 7
        %v1512 = vsub.s32 %v1509, %v1511
        %v1513 = vrot.slane %v1499, %v1512
        %v1514 = vcombine.high %v1506, 0
        %v1515 = vcombine.high %v1513, 0
        %v1518 = vpack.i.b16 %v1506, %v1472
        %v1520 = vshrl.u32 %v1472, 16
        %v1521 = vshrl.u32 %v1506, 16
        %v1522 = vpack.i.b16 %v1521, %v1520
        %v1526 = vpack.i.b16 %v1514, %v1480
        %v1528 = vshrl.u32 %v1480, 16
        %v1529 = vshrl.u32 %v1514, 16
        %v1530 = vpack.i.b16 %v1529, %v1528
        %v1534 = vpack.i.b16 %v1513, %v1479
        %v1536 = vshrl.u32 %v1479, 16
        %v1537 = vshrl.u32 %v1513, 16
        %v1538 = vpack.i.b16 %v1537, %v1536
        %v1542 = vpack.i.b16 %v1515, %v1481
        %v1544 = vshrl.u32 %v1481, 16
        %v1545 = vshrl.u32 %v1515, 16
        %v1546 = vpack.i.b16 %v1545, %v1544
        %v1548 = vcombine.low %v1518, %v1534
        %v1550 = vunpack.c.l.s4 1983009808
        %v1551 = vunpack.c.0.s8 %v1550
        %v1552 = vlaneseq
        %v1553 = vshrl.u32 %v1552, 7
        %v1554 = vsub.s32 %v1551, %v1553
        %v1555 = vrot.slane %v1548, %v1554
        %v1556 = vcombine.low %v1526, %v1542
        %v1558 = vunpack.c.l.s4 1983009808
        %v1559 = vunpack.c.0.s8 %v1558
        %v1560 = vlaneseq
        %v1561 = vshrl.u32 %v1560, 7
        %v1562 = vsub.s32 %v1559, %v1561
        %v1563 = vrot.slane %v1556, %v1562
        %v1564 = vcombine.low %v1555, %v1563
        %v1566 = vunpack.c.l.s4 1934713408
        %v1567 = vunpack.c.0.s8 %v1566
        %v1568 = vlaneseq
        %v1569 = vshrl.u32 %v1568, 7
        %v1570 = vsub.s32 %v1567, %v1569
        %v1571 = vrot.slane %v1564, %v1570
        %v1572 = vcombine.high %v1571, 0
        %v1573 = vcombine.low %v1522, %v1538
        %v1575 = vunpack.c.l.s4 1983009808
        %v1576 = vunpack.c.0.s8 %v1575
        %v1577 = vlaneseq
        %v1578 = vshrl.u32 %v1577, 7
        %v1579 = vsub.s32 %v1576, %v1578
        %v1580 = vrot.slane %v1573, %v1579
        %v1581 = vcombine.low %v1530, %v1546
        %v1583 = vunpack.c.l.s4 1983009808
        %v1584 = vunpack.c.0.s8 %v1583
        %v1585 = vlaneseq
        %v1586 = vshrl.u32 %v1585, 7
        %v1587 = vsub.s32 %v1584, %v1586
        %v1588 = vrot.slane %v1581, %v1587
        %v1589 = vcombine.low %v1580, %v1588
        %v1591 = vunpack.c.l.s4 1934713408
        %v1592 = vunpack.c.0.s8 %v1591
        %v1593 = vlaneseq
        %v1594 = vshrl.u32 %v1593, 7
        %v1595 = vsub.s32 %v1592, %v1594
        %v1596 = vrot.slane %v1589, %v1595
        %v1597 = vcombine.high %v1596, 0
        %v1600 = vpack.i.b16 %v1596, %v1571
        %v1601 = vshrl.u32 %v1571, 16
        %v1602 = vshrl.u32 %v1596, 16
        %v1603 = vpack.i.b16 %v1602, %v1601
        %v1606 = vpack.i.b16 %v1597, %v1572
        %v1607 = vshrl.u32 %v1572, 16
        %v1608 = vshrl.u32 %v1597, 16
        %v1609 = vpack.i.b16 %v1608, %v1607
        %1610 = vrot.lane.b32.xlu0 %v1603, 8
        %v1611 = vpop.permute.xlu0 %1610
        %1612 = vrot.lane.b32.xlu0 %v1606, 16
        %v1613 = vpop.permute.xlu0 %1612
        %1614 = vrot.lane.b32.xlu0 %v1609, 24
        %v1615 = vpop.permute.xlu0 %1614
        %v1618 = vsel %vm1030, %v1600, %v1611
        %vm1619 = vcmask 130048
        %v1621 = vsel %vm1619, %v1618, %v1613
        %vm1622 = vcmask 195584
        %v1624 = vsel %vm1622, %v1621, %v1615
        %v1625 = vld [vmem:[%s3] sm:$0xf]
        %v1626 = vld [vmem:[%s3 + $0x4] sm:$0xf]
        %v1627 = vld [vmem:[%s3 + $0x8] sm:$0xf]
        %v1628 = vld [vmem:[%s3 + $0xc] sm:$0xf]
        %v1629 = vld [vmem:[%s4] sm:$0x1]
        %v1631 = vlaneseq
        %v1632 = vshrl.u32 %v1631, 7
        %v1633 = vsub.s32 0, %v1632
        %v1634 = vrot.slane %v1629, %v1633
        %v1640 = vunpack.c.l.b16 %v1625
        %v1641 = vunpack.c.l.b16 %v1626
        %v1642 = vunpack.c.l.b16 %v1627
        %v1643 = vunpack.c.l.b16 %v1628
        %v1644 = vpack.c.b16 %v1641, %v1640
        %v1645 = vpack.c.b16 %v1643, %v1642
        %v1648 = vsel %vm477, %v1624, 0
        %1650 = vmatprep.subr.bf16.mxu0 0
        %1651 = vmatpush1.bf16.msra.mxu0 %v1644
        %1652 = vmatprep.subr.bf16.mxu0 0
        %1653 = vmatpush1.bf16.msra.mxu0 %v1645
        %1654 = vmatprep.subr.bf16.mxu0 0
        %1655 = vmatpush1.bf16.msra.mxu0 0
        %1656 = vmatprep.subr.bf16.mxu0 0
        %1657 = vmatpush1.bf16.msra.mxu0 0
        %1658 = vmatprep.subr.bf16.mxu0 0
        %1659 = vmatpush1.bf16.msra.mxu0 0
        %1660 = vmatprep.subr.bf16.mxu0 0
        %1661 = vmatpush1.bf16.msra.mxu0 0
        %1662 = vmatprep.subr.bf16.mxu0 0
        %1663 = vmatpush1.bf16.msra.mxu0 0
        %1664 = vmatprep.subr.bf16.mxu0 0
        %1665 = vmatpush1.bf16.msra.mxu0 0
        %1666 = vmatprep.subr.bf16.mxu0 0
        %1667 = vmatpush1.bf16.msra.mxu0 0
        %1668 = vmatprep.subr.bf16.mxu0 0
        %1669 = vmatpush1.bf16.msra.mxu0 0
        %1670 = vmatprep.subr.bf16.mxu0 0
        %1671 = vmatpush1.bf16.msra.mxu0 0
        %1672 = vmatprep.subr.bf16.mxu0 0
        %1673 = vmatpush1.bf16.msra.mxu0 0
        %1674 = vmatprep.subr.bf16.mxu0 0
        %1675 = vmatpush1.bf16.msra.mxu0 0
        %1676 = vmatprep.subr.bf16.mxu0 0
        %1677 = vmatpush1.bf16.msra.mxu0 0
        %1678 = vmatprep.subr.bf16.mxu0 0
        %1679 = vmatpush1.bf16.msra.mxu0 0
        %1680 = vmatprep.subr.bf16.mxu0 0
        %1681 = vmatpush1.bf16.msra.mxu0 0
        %1682 = vmatprep.mubr.bf16.mxu0 0
        %1683 = vmatmul.mubr.bf16.gmra.mrb[0].mxu0 %v1648
        %v1684 = vpop.f32.mrb[0].mxu0
        %v1685 = vadd.f32 %v1634, %v1684
        %v1686 = vpop.f32.mrb[0].mxu0
        %v1687 = vpop.f32.mrb[0].mxu0
        %v1688 = vpop.f32.mrb[0].mxu0
        %1689 = vdwg.mxu0
        %v1690 = vadd.f32 %v452, %v1685
        %v1691 = vld [vmem:[%s9] sm:$0x1]
        %v1692 = vld [vmem:[%s10] sm:$0x1]
        %v1693 = vsel %vm477, %v1690, 0.0
        %1694 = vadd.xlane.f32.xlu0 %v1693
        %v1695 = vpop.xlane.xlu0 %1694
        %v1696 = vrcp.pop 32.0
        %v1697 = vmul.f32 %v1695, %v1696
        %v1698 = vsub.f32 %v1690, %v1697
        %v1699 = vmul.f32 %v1698, %v1698
        %v1700 = vsel %vm477, %v1699, 0.0
        %1701 = vadd.xlane.f32.xlu0 %v1700
        %v1702 = vpop.xlane.xlu0 %1701
        %v1703 = vmul.f32 %v1702, %v1696
        %v1704 = vadd.f32 %v1703, 1e-06
        %v1705 = vrsqrt.pop %v1704
        %v1706 = vmul.f32 %v1698, %v1705
        %v1708 = vlaneseq
        %v1709 = vshrl.u32 %v1708, 7
        %v1710 = vsub.s32 0, %v1709
        %v1711 = vrot.slane %v1691, %v1710
        %v1713 = vmul.f32 %v1706, %v1711
        %v1715 = vlaneseq
        %v1716 = vshrl.u32 %v1715, 7
        %v1717 = vsub.s32 0, %v1716
        %v1718 = vrot.slane %v1692, %v1717
        %v1720 = vadd.f32 %v1713, %v1718
        %v1721 = vpack.c.bf16 %v1720, %v1720
        %v1722 = vld [vmem:[#allocation2] sm:$0xf]
        %v1723 = vld [vmem:[#allocation2 + $0x4] sm:$0xf]
        %v1724 = vld [vmem:[#allocation2 + $0x8] sm:$0xf]
        %v1725 = vld [vmem:[#allocation2 + $0xc] sm:$0xf]
        %v1726 = vld [vmem:[%s6] sm:$0x1]
        %v1728 = vlaneseq
        %v1729 = vshrl.u32 %v1728, 7
        %v1730 = vsub.s32 0, %v1729
        %v1731 = vrot.slane %v1726, %v1730
        %v1737 = vunpack.c.l.b16 %v1722
        %v1738 = vunpack.c.l.b16 %v1723
        %v1739 = vunpack.c.l.b16 %v1724
        %v1740 = vunpack.c.l.b16 %v1725
        %v1741 = vpack.c.b16 %v1738, %v1737
        %v1742 = vpack.c.b16 %v1740, %v1739
        %v1746 = vsel %vm477, %v1721, 0
        %1748 = vmatprep.subr.bf16.mxu0 0
        %1749 = vmatpush1.bf16.msra.mxu0 %v1741
        %1750 = vmatprep.subr.bf16.mxu0 0
        %1751 = vmatpush1.bf16.msra.mxu0 %v1742
        %1752 = vmatprep.subr.bf16.mxu0 0
        %1753 = vmatpush1.bf16.msra.mxu0 0
        %1754 = vmatprep.subr.bf16.mxu0 0
        %1755 = vmatpush1.bf16.msra.mxu0 0
        %1756 = vmatprep.subr.bf16.mxu0 0
        %1757 = vmatpush1.bf16.msra.mxu0 0
        %1758 = vmatprep.subr.bf16.mxu0 0
        %1759 = vmatpush1.bf16.msra.mxu0 0
        %1760 = vmatprep.subr.bf16.mxu0 0
        %1761 = vmatpush1.bf16.msra.mxu0 0
        %1762 = vmatprep.subr.bf16.mxu0 0
        %1763 = vmatpush1.bf16.msra.mxu0 0
        %1764 = vmatprep.subr.bf16.mxu0 0
        %1765 = vmatpush1.bf16.msra.mxu0 0
        %1766 = vmatprep.subr.bf16.mxu0 0
        %1767 = vmatpush1.bf16.msra.mxu0 0
        %1768 = vmatprep.subr.bf16.mxu0 0
        %1769 = vmatpush1.bf16.msra.mxu0 0
        %1770 = vmatprep.subr.bf16.mxu0 0
        %1771 = vmatpush1.bf16.msra.mxu0 0
        %1772 = vmatprep.subr.bf16.mxu0 0
        %1773 = vmatpush1.bf16.msra.mxu0 0
        %1774 = vmatprep.subr.bf16.mxu0 0
        %1775 = vmatpush1.bf16.msra.mxu0 0
        %1776 = vmatprep.subr.bf16.mxu0 0
        %1777 = vmatpush1.bf16.msra.mxu0 0
        %1778 = vmatprep.subr.bf16.mxu0 0
        %1779 = vmatpush1.bf16.msra.mxu0 0
        %1780 = vmatprep.mubr.bf16.mxu0 0
        %1781 = vmatmul.mubr.bf16.gmra.mrb[0].mxu0 %v1746
        %v1782 = vpop.f32.mrb[0].mxu0
        %v1783 = vadd.f32 %v1731, %v1782
        %v1784 = vpop.f32.mrb[0].mxu0
        %v1785 = vpop.f32.mrb[0].mxu0
        %v1786 = vpop.f32.mrb[0].mxu0
        %1787 = vdwg.mxu0
        %v1788 = vmax.f32 %v1783, 0.0
        %v1789 = vpack.c.bf16 %v1788, %v1788
        %v1790 = vld [vmem:[%s7] sm:$0xf]
        %v1791 = vld [vmem:[%s7 + $0x4] sm:$0xf]
        %v1792 = vld [vmem:[%s7 + $0x8] sm:$0xf]
        %v1793 = vld [vmem:[%s7 + $0xc] sm:$0xf]
        %v1794 = vld [vmem:[%s7 + $0x10] sm:$0xf]
        %v1795 = vld [vmem:[%s7 + $0x14] sm:$0xf]
        %v1796 = vld [vmem:[%s7 + $0x18] sm:$0xf]
        %v1797 = vld [vmem:[%s7 + $0x1c] sm:$0xf]
        %v1798 = vld [vmem:[%s8] sm:$0x1]
        %v1800 = vlaneseq
        %v1801 = vshrl.u32 %v1800, 7
        %v1802 = vsub.s32 0, %v1801
        %v1803 = vrot.slane %v1798, %v1802
        %v1813 = vunpack.c.l.b16 %v1790
        %v1814 = vunpack.c.l.b16 %v1791
        %v1815 = vunpack.c.l.b16 %v1792
        %v1816 = vunpack.c.l.b16 %v1793
        %v1817 = vunpack.c.l.b16 %v1794
        %v1818 = vunpack.c.l.b16 %v1795
        %v1819 = vunpack.c.l.b16 %v1796
        %v1820 = vunpack.c.l.b16 %v1797
        %v1821 = vpack.c.b16 %v1814, %v1813
        %v1822 = vpack.c.b16 %v1816, %v1815
        %v1823 = vpack.c.b16 %v1818, %v1817
        %v1824 = vpack.c.b16 %v1820, %v1819
        %vm1829 = vcmask 523264
        %v1831 = vsel %vm1829, %v1789, 0
        %1833 = vmatprep.subr.bf16.mxu0 0
        %1834 = vmatpush1.bf16.msra.mxu0 %v1821
        %1835 = vmatprep.subr.bf16.mxu0 0
        %1836 = vmatpush1.bf16.msra.mxu0 %v1822
        %1837 = vmatprep.subr.bf16.mxu0 0
        %1838 = vmatpush1.bf16.msra.mxu0 %v1823
        %1839 = vmatprep.subr.bf16.mxu0 0
        %1840 = vmatpush1.bf16.msra.mxu0 %v1824
        %1841 = vmatprep.subr.bf16.mxu0 0
        %1842 = vmatpush1.bf16.msra.mxu0 0
        %1843 = vmatprep.subr.bf16.mxu0 0
        %1844 = vmatpush1.bf16.msra.mxu0 0
        %1845 = vmatprep.subr.bf16.mxu0 0
        %1846 = vmatpush1.bf16.msra.mxu0 0
        %1847 = vmatprep.subr.bf16.mxu0 0
        %1848 = vmatpush1.bf16.msra.mxu0 0
        %1849 = vmatprep.subr.bf16.mxu0 0
        %1850 = vmatpush1.bf16.msra.mxu0 0
        %1851 = vmatprep.subr.bf16.mxu0 0
        %1852 = vmatpush1.bf16.msra.mxu0 0
        %1853 = vmatprep.subr.bf16.mxu0 0
        %1854 = vmatpush1.bf16.msra.mxu0 0
        %1855 = vmatprep.subr.bf16.mxu0 0
        %1856 = vmatpush1.bf16.msra.mxu0 0
        %1857 = vmatprep.subr.bf16.mxu0 0
        %1858 = vmatpush1.bf16.msra.mxu0 0
        %1859 = vmatprep.subr.bf16.mxu0 0
        %1860 = vmatpush1.bf16.msra.mxu0 0
        %1861 = vmatprep.subr.bf16.mxu0 0
        %1862 = vmatpush1.bf16.msra.mxu0 0
        %1863 = vmatprep.subr.bf16.mxu0 0
        %1864 = vmatpush1.bf16.msra.mxu0 0
        %1865 = vmatprep.mubr.bf16.mxu0 0
        %1866 = vmatmul.mubr.bf16.gmra.mrb[0].mxu0 %v1831
        %v1867 = vpop.f32.mrb[0].mxu0
        %v1868 = vadd.f32 %v1803, %v1867
        %v1869 = vpop.f32.mrb[0].mxu0
        %v1870 = vpop.f32.mrb[0].mxu0
        %v1871 = vpop.f32.mrb[0].mxu0
        %1872 = vdwg.mxu0
        %v1873 = vadd.f32 %v1720, %v1868
        %v1874 = vld [vmem:[%s11] sm:$0x1]
        %v1875 = vld [vmem:[%s12] sm:$0x1]
        %v1876 = vsel %vm477, %v1873, 0.0
        %1877 = vadd.xlane.f32.xlu0 %v1876
        %v1878 = vpop.xlane.xlu0 %1877
        %v1879 = vmul.f32 %v1878, %v1696
        %v1880 = vsub.f32 %v1873, %v1879
        %v1881 = vmul.f32 %v1880, %v1880
        %v1882 = vsel %vm477, %v1881, 0.0
        %1883 = vadd.xlane.f32.xlu0 %v1882
        %v1884 = vpop.xlane.xlu0 %1883
        %v1885 = vmul.f32 %v1884, %v1696
        %v1886 = vadd.f32 %v1885, 1e-06
        %v1887 = vrsqrt.pop %v1886
        %v1888 = vmul.f32 %v1880, %v1887
        %v1890 = vlaneseq
        %v1891 = vshrl.u32 %v1890, 7
        %v1892 = vsub.s32 0, %v1891
        %v1893 = vrot.slane %v1874, %v1892
        %v1895 = vmul.f32 %v1888, %v1893
        %v1897 = vlaneseq
        %v1898 = vshrl.u32 %v1897, 7
        %v1899 = vsub.s32 0, %v1898
        %v1900 = vrot.slane %v1875, %v1899
        %v1902 = vadd.f32 %v1895, %v1900
        %1903 = vst.msk [vmem:[%s446] sm:$0xff] %vm477, %v1902
        %s1904 = sand.u32 %s314, 1
        %s1905 = scalar_lea.sflag [#allocation4], %s1904
        %s1906 = sand.u32 %s314, 1
        %s1907 = smul.addr %s1906, 8
        %s1908 = scalar_lea.vmem [#allocation5], %s1907
        // Predicated region
        $region77: #{tpu_custom_call.1} parent=71 // pred_check
          %p1909 = pneg %p324
        $region78: #{tpu_custom_call.1} parent=71 // pred_check_branch
          %1911 = sbr.rel (%p1909) target = $region80
        $region79: #{tpu_custom_call.1} parent=71 // pred_region
          %s1913 = ssub.s32 128, 128
          %1914 = vsyncadd %s1905, %s1913
          %s1915 = smul.addr %s28, 128
          %s1916 = scalar_lea.hbm %s13, %s1915
          %s1918 = sshll.u32 %s1908, 4
          %s1919 = int_to_ptr.vmem [resolvable:$true] %s1918
          %1921 = dma.vmem_to_hbm [thread:$0]  %s1919, 128, %s1916, %s1905
        $region80: #{tpu_custom_call.1} parent=71 // pred_fallthru
          _
      $region72: #{tpu_custom_call.1} parent=5 // pred_fallthru
        _
      %p1922 = scmp.le.s32.totalorder 2, %s23
      // Predicated region
      $region81: #{tpu_custom_call.1} parent=5 // pred_check
        %p1923 = pneg %p1922
      $region82: #{tpu_custom_call.1} parent=5 // pred_check_branch
        %1925 = sbr.rel (%p1923) target = $region84
      $region83: #{tpu_custom_call.1} parent=5 // pred_region
        %s1926 = ssub.s32 %s23, 2
        // Predicated region
        $region85: #{tpu_custom_call.1} parent=83 // pred_check
          %p1927 = pneg %p330
        $region86: #{tpu_custom_call.1} parent=83 // pred_check_branch
          %1929 = sbr.rel (%p1927) target = $region88
        $region87: #{tpu_custom_call.1} parent=83 // pred_region
          %s1930 = sand.u32 %s315, 1
          %s1931 = scalar_lea.sflag [#allocation4], %s1930
          %s1932 = sand.u32 %s315, 1
          %s1933 = smul.addr %s1932, 8
          %s1934 = scalar_lea.vmem [#allocation5], %s1933
          %1935 = dma.done %s1931, 128
        $region88: #{tpu_custom_call.1} parent=83 // pred_fallthru
          _
      $region84: #{tpu_custom_call.1} parent=5 // pred_fallthru
        _
    $region6: #{tpu_custom_call.1} parent=1 // loop_footer
      %s27 = sadd.s32 1, %s23
    $region7: #{tpu_custom_call.1} parent=1 // loop_footer_branch
      %22 = sbr.rel target = $region3
    $region8: #{tpu_custom_call.1} parent=1 // loop_exit
      _
    %1936 = vsyncpa [#allocation3], 1
    %s1937 = scalar_lea.sflag [#allocation3], 1
    %1938 = vsyncpa %s1937, 1
    %1939 = vsyncpa [#allocation4], 1
    %s1940 = scalar_lea.sflag [#allocation4], 1
    %1941 = vsyncpa %s1940, 1

</llo_original>
